<compile_context>
chip_gen: v5e
topology: v5e:2x2
jax: 0.10.0
libtpu: 0.0.40
codegen_flags: <defaults>
</compile_context>

<pallas_src>
import functools

import jax
import jax.numpy as jnp
from jax.experimental import pallas as pl
from jax.experimental.pallas import tpu as pltpu

_EPS = 1e-5


def _round_up(v, m):
    return ((v + m - 1) // m) * m


@functools.lru_cache(maxsize=1)
def _vmem_limit_bytes():
    try:
        cap = int(pltpu.get_tpu_info().vmem_capacity_bytes)
    except Exception:
        cap = 64 * 1024 * 1024          # conservative fallback (v7x-sized)
    return int(min(96 * 1024 * 1024, max(32 * 1024 * 1024, (3 * cap) // 4)))


def _compiler_params():
    return pltpu.CompilerParams(
        dimension_semantics=("parallel",),      # batch elements are independent
        vmem_limit_bytes=_vmem_limit_bytes(),
    )


# ------------------------------ Pallas kernels ------------------------------

def _make_conv1_kernel(K, Ho, Wo, has_shortcut):
    """relu(bn1(x)) -> K*K-tap conv1 -> relu(bn2(.)) epilogue, plus optionally
    the 1x1 (stride-s) shortcut conv computed from the centre tap."""

    def kernel(*refs):
        if has_shortcut:
            (x_ref, s1_ref, b1_ref, w_ref, s2_ref, b2_ref, ws_ref,
             act2_ref, short_ref, scr) = refs
        else:
            (x_ref, s1_ref, b1_ref, w_ref, s2_ref, b2_ref,
             act2_ref, scr) = refs

        Hi, Wi, Cp = x_ref.shape[1], x_ref.shape[2], x_ref.shape[3]
        Np = act2_ref.shape[3]

        # act1 = relu(bn1(x)); the conv zero-halo must be applied AFTER bn+relu
        # (PyTorch pads inside conv1), so it lives in a zeroed VMEM scratch.
        # act1 never touches HBM.
        scr[...] = jnp.zeros_like(scr)
        act1 = jnp.maximum(x_ref[0] * s1_ref[...] + b1_ref[...], 0.0)
        scr[1:Hi + 1, 1:Wi + 1, :] = act1

        acc = jnp.zeros((Ho * Wo, Np), jnp.float32)
        for kh in range(K):
            for kw in range(K):
                lhs = scr[kh:kh + Ho, kw:kw + Wo, :].reshape(Ho * Wo, Cp)
                acc = acc + jnp.dot(lhs.astype(jnp.bfloat16),
                                    w_ref[kh * K + kw],
                                    preferred_element_type=jnp.float32)

        act2 = jnp.maximum(acc * s2_ref[...] + b2_ref[...], 0.0)
        act2_ref[0] = act2.reshape(Ho, Wo, Np).astype(act2_ref.dtype)

        if has_shortcut:
            # convShortcut(relu(bn1(x))) == centre tap of the scratch; ws rows
            # beyond the true input channels are zero (s2d: phase (0,0) only).
            ctr = scr[1:1 + Ho, 1:1 + Wo, :].reshape(Ho * Wo, Cp)
            sc = jnp.dot(ctr.astype(jnp.bfloat16), ws_ref[...],
                         preferred_element_type=jnp.float32)
            short_ref[0] = sc.reshape(Ho, Wo, Np).astype(short_ref.dtype)

    return kernel


def _make_conv2_kernel(Ho, Wo):
    """conv2 (3x3, stride 1, pad 1) as a 9-tap reduction with the residual add
    fused into the epilogue."""

    def kernel(a_ref, w_ref, r_ref, out_ref, scr):
        Np = a_ref.shape[3]
        scr[...] = jnp.zeros_like(scr)
        scr[1:Ho + 1, 1:Wo + 1, :] = a_ref[0].astype(scr.dtype)

        acc = jnp.zeros((Ho * Wo, Np), jnp.float32)
        for kh in range(3):
            for kw in range(3):
                lhs = scr[kh:kh + Ho, kw:kw + Wo, :].reshape(Ho * Wo, Np)
                acc = acc + jnp.dot(lhs.astype(jnp.bfloat16),
                                    w_ref[kh * 3 + kw],
                                    preferred_element_type=jnp.float32)

        out_ref[0] = (acc.reshape(Ho, Wo, Np) + r_ref[0]).astype(out_ref.dtype)

    return kernel


# --------------------------- pallas_call wrappers ---------------------------

def _conv1_call(xin, s1, b1, w1, s2, b2, ws_mat, *, K, Ho, Wo):
    N, Hi, Wi, Cp = xin.shape
    KK, _, Np = w1.shape
    assert KK == K * K
    has_shortcut = ws_mat is not None

    in_specs = [
        pl.BlockSpec((1, Hi, Wi, Cp), lambda n: (n, 0, 0, 0)),
        pl.BlockSpec((1, Cp), lambda n: (0, 0)),
        pl.BlockSpec((1, Cp), lambda n: (0, 0)),
        pl.BlockSpec((KK, Cp, Np), lambda n: (0, 0, 0)),
        pl.BlockSpec((1, Np), lambda n: (0, 0)),
        pl.BlockSpec((1, Np), lambda n: (0, 0)),
    ]
    args = [xin, s1, b1, w1, s2, b2]
    out_shape = [jax.ShapeDtypeStruct((N, Ho, Wo, Np), jnp.bfloat16)]
    out_specs = [pl.BlockSpec((1, Ho, Wo, Np), lambda n: (n, 0, 0, 0))]
    if has_shortcut:
        in_specs.append(pl.BlockSpec((Cp, Np), lambda n: (0, 0)))
        args.append(ws_mat)
        out_shape.append(jax.ShapeDtypeStruct((N, Ho, Wo, Np), jnp.float32))
        out_specs.append(pl.BlockSpec((1, Ho, Wo, Np), lambda n: (n, 0, 0, 0)))

    res = pl.pallas_call(
        _make_conv1_kernel(K, Ho, Wo, has_shortcut),
        out_shape=tuple(out_shape) if has_shortcut else out_shape[0],
        grid=(N,),
        in_specs=in_specs,
        out_specs=tuple(out_specs) if has_shortcut else out_specs[0],
        scratch_shapes=[pltpu.VMEM((Hi + 2, Wi + 2, Cp), jnp.float32)],
        compiler_params=_compiler_params(),
    )(*args)
    if has_shortcut:
        return res[0], res[1]
    return res, None


def _conv2_call(act2, w2, residual):
    N, Ho, Wo, Np = act2.shape
    return pl.pallas_call(
        _make_conv2_kernel(Ho, Wo),
        out_shape=jax.ShapeDtypeStruct((N, Ho, Wo, Np), jnp.float32),
        grid=(N,),
        in_specs=[
            pl.BlockSpec((1, Ho, Wo, Np), lambda n: (n, 0, 0, 0)),
            pl.BlockSpec((9, Np, Np), lambda n: (0, 0, 0)),
            pl.BlockSpec((1, Ho, Wo, Np), lambda n: (n, 0, 0, 0)),
        ],
        out_specs=pl.BlockSpec((1, Ho, Wo, Np), lambda n: (n, 0, 0, 0)),
        scratch_shapes=[pltpu.VMEM((Ho + 2, Wo + 2, Np), jnp.float32)],
        compiler_params=_compiler_params(),
    )(act2, w2, residual)


# ------------------------------ glue (pure JAX) ------------------------------

def _bn_affine(gamma, beta, mean, var):
    scale = gamma / jnp.sqrt(var + _EPS)
    return scale, beta - mean * scale


def _space_to_depth(x_nhwc):
    """(N,H,W,C) -> (N,H/2,W/2,4C); channel order (ph, pw, c) with phase (0,0)
    first — the weight / shortcut mapping below relies on this order."""
    N, H, W, C = x_nhwc.shape
    x = x_nhwc.reshape(N, H // 2, 2, W // 2, 2, C)
    x = jnp.transpose(x, (0, 1, 3, 2, 4, 5))
    return x.reshape(N, H // 2, W // 2, 4 * C)


def _w_taps_3x3(w_oihw, Cp, Np):
    """(Cout,Cin,3,3) -> bf16 (9, Cp, Np) per-tap matrices (tap = kh*3+kw);
    padded rows/columns are exactly zero (required for lane-pad correctness)."""
    co, ci = w_oihw.shape[0], w_oihw.shape[1]
    w = jnp.transpose(w_oihw, (2, 3, 1, 0)).reshape(9, ci, co)
    w = jnp.pad(w, ((0, 0), (0, Cp - ci), (0, Np - co)))
    return w.astype(jnp.bfloat16)


def _w_taps_s2d(w_oihw, Cp, Np):
    """3x3 stride-2 conv re-expressed as a 2x2 stride-1 conv over the
    space-to-depth input: tap kh maps to (dh,ph) = ((kh+1)//2, (kh+1)%2)
    (same for kw); 7 of the 16 (tap, phase) weight slots stay zero."""
    co, ci = w_oihw.shape[0], w_oihw.shape[1]
    w = jnp.zeros((2, 2, 4, ci, co), w_oihw.dtype)
    for kh in range(3):
        dh, ph = (kh + 1) // 2, (kh + 1) % 2
        for kw in range(3):
            dw, pw = (kw + 1) // 2, (kw + 1) % 2
            w = w.at[dh, dw, ph * 2 + pw].set(jnp.transpose(w_oihw[:, :, kh, kw]))
    w = w.reshape(4, 4 * ci, co)
    w = jnp.pad(w, ((0, 0), (0, Cp - 4 * ci), (0, Np - co)))
    return w.astype(jnp.bfloat16)


# ----------------------------- BasicBlock forward -----------------------------

def basic_block_forward_nhwc(x_nhwc, params, stride):
    """WideResNet BasicBlock forward (inference).  x_nhwc: (N,H,W,Cin) f32."""
    conv1_w = params["conv1_w"]
    out_planes, in_planes = int(conv1_w.shape[0]), int(conv1_w.shape[1])
    equal_in_out = in_planes == out_planes
    assert stride in (1, 2), "WRN-CIFAR only uses stride 1 or 2"
    assert not (equal_in_out and stride != 1), \
        "equalInOut residual (x + out) requires stride == 1"

    N, H, W, C = x_nhwc.shape
    assert C == in_planes
    Np = _round_up(out_planes, 128)
    Ho, Wo = H // stride, W // stride

    s1, b1 = _bn_affine(params["bn1_gamma"], params["bn1_beta"],
                        params["bn1_mean"], params["bn1_var"])
    s2, b2 = _bn_affine(params["bn2_gamma"], params["bn2_beta"],
                        params["bn2_mean"], params["bn2_var"])

    if stride == 2:
        assert H % 2 == 0 and W % 2 == 0
        xin = _space_to_depth(x_nhwc)
        c_eff = 4 * C
        s1e, b1e = jnp.tile(s1, 4), jnp.tile(b1, 4)   # per-phase copies
        K1 = 2
    else:
        xin, c_eff, s1e, b1e, K1 = x_nhwc, C, s1, b1, 3

    # Channels zero-padded to a multiple of 128: every Pallas block is
    # lane-dense.  The pads are inert because bn scale/shift pads are zero
    # (relu(0*x+0)=0) and weight pad rows/columns are zero.
    Cp = _round_up(c_eff, 128)
    if Cp != c_eff:
        xin = jnp.pad(xin, ((0, 0), (0, 0), (0, 0), (0, Cp - c_eff)))
    s1p = jnp.pad(s1e, (0, Cp - c_eff)).reshape(1, Cp)
    b1p = jnp.pad(b1e, (0, Cp - c_eff)).reshape(1, Cp)
    s2p = jnp.pad(s2, (0, Np - out_planes)).reshape(1, Np)
    b2p = jnp.pad(b2, (0, Np - out_planes)).reshape(1, Np)

    w1 = (_w_taps_s2d if stride == 2 else _w_taps_3x3)(conv1_w, Cp, Np)

    ws_mat = None
    if not equal_in_out:
        ws = jnp.transpose(params["short_w"][:, :, 0, 0])        # (Cin, Cout)
        ws_mat = jnp.zeros((Cp, Np), jnp.float32)
        ws_mat = ws_mat.at[:in_planes, :out_planes].set(ws).astype(jnp.bfloat16)

    # (A) conv1 with fused bn1/relu (input side) + bn2/relu (epilogue)
    #     [+ fused 1x1 shortcut when in_planes != out_planes].
    act2, short = _conv1_call(xin, s1p, b1p, w1, s2p, b2p, ws_mat,
                              K=K1, Ho=Ho, Wo=Wo)
    # dropRate == 0.0 -> dropout is the identity.

    # (B) conv2 with the residual add fused into the epilogue.
    residual = xin if equal_in_out else short     # equal_in_out => Cp == Np
    w2 = _w_taps_3x3(params["conv2_w"], Np, Np)
    out = _conv2_call(act2, w2, residual)         # (N, Ho, Wo, Np) f32

    return out[..., :out_planes]


@functools.partial(jax.jit, static_argnums=(2,))
def basic_block_forward(x_nchw, params, stride):
    """NCHW wrapper (PyTorch layout).  In a full network keep NHWC end-to-end
    and call basic_block_forward_nhwc directly to avoid per-block transposes."""
    x = jnp.transpose(x_nchw, (0, 2, 3, 1)).astype(jnp.float32)
    out = basic_block_forward_nhwc(x, params, stride)
    return jnp.transpose(out, (0, 3, 1, 2))


# --------------------------------- reference ---------------------------------
# Mirrors the kernel's precision (bf16 conv operands, f32 accumulation, f32
# affine-BN / relu / residual) so the comparison isolates kernel correctness.

def _conv_ref(x_nchw, w_oihw, stride, padding):
    return jax.lax.conv_general_dilated(
        x_nchw.astype(jnp.bfloat16), w_oihw.astype(jnp.bfloat16),
        window_strides=(stride, stride),
        padding=((padding, padding), (padding, padding)),
        dimension_numbers=("NCHW", "OIHW", "NCHW"),
        preferred_element_type=jnp.float32)


@functools.partial(jax.jit, static_argnums=(2,))
def basic_block_ref(x, p, stride):
    s1, b1 = _bn_affine(p["bn1_gamma"], p["bn1_beta"], p["bn1_mean"], p["bn1_var"])
    s2, b2 = _bn_affine(p["bn2_gamma"], p["bn2_beta"], p["bn2_mean"], p["bn2_var"])
    aff = lambda v, s, b: v * s[None, :, None, None] + b[None, :, None, None]
    out_planes, in_planes = p["conv1_w"].shape[0], p["conv1_w"].shape[1]
    equal = in_planes == out_planes
    a1 = jax.nn.relu(aff(x, s1, b1))
    c1 = _conv_ref(a1, p["conv1_w"], stride, 1)
    a2 = jax.nn.relu(aff(c1, s2, b2))
    c2 = _conv_ref(a2, p["conv2_w"], 1, 1)
    res = x if equal else _conv_ref(a1, p["short_w"], stride, 0)
    return res + c2


# ------------------------------------ main ------------------------------------

def _make_params(key, in_planes, out_planes):
    ks = jax.random.split(key, 11)
    return dict(
        bn1_gamma=jax.random.uniform(ks[0], (in_planes,), jnp.float32, 0.8, 1.2),
        bn1_beta=0.1 * jax.random.normal(ks[1], (in_planes,), jnp.float32),
        bn1_mean=0.1 * jax.random.normal(ks[2], (in_planes,), jnp.float32),
        bn1_var=jax.random.uniform(ks[3], (in_planes,), jnp.float32, 0.5, 1.5),
        conv1_w=0.1 * jax.random.normal(ks[4], (out_planes, in_planes, 3, 3), jnp.float32),
        bn2_gamma=jax.random.uniform(ks[5], (out_planes,), jnp.float32, 0.8, 1.2),
        bn2_beta=0.1 * jax.random.normal(ks[6], (out_planes,), jnp.float32),
        bn2_mean=0.1 * jax.random.normal(ks[7], (out_planes,), jnp.float32),
        bn2_var=jax.random.uniform(ks[8], (out_planes,), jnp.float32, 0.5, 1.5),
        conv2_w=0.1 * jax.random.normal(ks[9], (out_planes, out_planes, 3, 3), jnp.float32),
        short_w=0.1 * jax.random.normal(ks[10], (out_planes, in_planes, 1, 1), jnp.float32),
    )


if __name__ == "__main__":
    key = jax.random.PRNGKey(0)
    # case 0: not equalInOut (16 -> 32, stride 2) -> space-to-depth conv1 + fused shortcut
    # case 1: equalInOut     (16 -> 16, stride 1) -> raw-x residual fused into conv2
    cases = [(16, 32, 2), (16, 16, 1)]
    for idx, (cin, cout, stride) in enumerate(cases):
        kx, kp = jax.random.split(jax.random.fold_in(key, idx))
        x = jax.random.normal(kx, (2, cin, 16, 16), jnp.float32)
        params = _make_params(kp, cin, cout)

        out = jax.block_until_ready(basic_block_forward(x, params, stride))
        ref = jax.block_until_ready(basic_block_ref(x, params, stride))

        expected = (2, cout, 16 // stride, 16 // stride)
        assert out.shape == expected and ref.shape == expected, (out.shape, ref.shape)
        err = float(jnp.max(jnp.abs(out - ref)))
        tol = 1e-2 + 1e-2 * float(jnp.max(jnp.abs(ref)))
        assert err <= tol, f"case {idx}: max abs err {err} > tol {tol}"
    print("KERNEL_OK")
</pallas_src>

<mosaic_0001>
module attributes {stable_mosaic.version = 11 : i64} {
  func.func @kernel(%arg0: i32, %arg1: memref<1x8x8x128xf32, #tpu.memory_space<vmem>>, %arg2: memref<1x128xf32, #tpu.memory_space<vmem>>, %arg3: memref<1x128xf32, #tpu.memory_space<vmem>>, %arg4: memref<4x128x128xbf16, #tpu.memory_space<vmem>>, %arg5: memref<1x128xf32, #tpu.memory_space<vmem>>, %arg6: memref<1x128xf32, #tpu.memory_space<vmem>>, %arg7: memref<128x128xbf16, #tpu.memory_space<vmem>>, %arg8: memref<1x8x8x128xbf16, #tpu.memory_space<vmem>>, %arg9: memref<1x8x8x128xf32, #tpu.memory_space<vmem>>, %arg10: memref<10x10x128xf32, #tpu.memory_space<vmem>>) attributes {dimension_semantics = [#tpu.dimension_semantics<parallel>], iteration_bounds = array<i64: 2>, scalar_prefetch = 0 : i64, scratch_operands = 1 : i64, tpu.core_type = #tpu.core_type<tc>, window_params = [{transform_indices = @transform_0, window_bounds = array<i64: 1, 8, 8, 128>}, {pipeline_mode = #tpu.pipeline_mode<synchronous>, transform_indices = @transform_1, window_bounds = array<i64: 1, 128>}, {pipeline_mode = #tpu.pipeline_mode<synchronous>, transform_indices = @transform_2, window_bounds = array<i64: 1, 128>}, {pipeline_mode = #tpu.pipeline_mode<synchronous>, transform_indices = @transform_3, window_bounds = array<i64: 4, 128, 128>}, {pipeline_mode = #tpu.pipeline_mode<synchronous>, transform_indices = @transform_4, window_bounds = array<i64: 1, 128>}, {pipeline_mode = #tpu.pipeline_mode<synchronous>, transform_indices = @transform_5, window_bounds = array<i64: 1, 128>}, {pipeline_mode = #tpu.pipeline_mode<synchronous>, transform_indices = @transform_6, window_bounds = array<i64: 128, 128>}, {transform_indices = @transform_7, window_bounds = array<i64: 1, 8, 8, 128>}, {transform_indices = @transform_8, window_bounds = array<i64: 1, 8, 8, 128>}]} {
    %cst = arith.constant 0.000000e+00 : f32
    %0 = vector.broadcast %cst : f32 to vector<10x10x128xf32>
    %c0 = arith.constant 0 : index
    %c0_0 = arith.constant 0 : index
    %c0_1 = arith.constant 0 : index
    %1 = vector.load %arg10[%c0, %c0_0, %c0_1] : memref<10x10x128xf32, #tpu.memory_space<vmem>>, vector<10x10x128xf32>
    tpu.vector_store %arg10[%c0, %c0_0, %c0_1], %0 {strides = array<i32>} : memref<10x10x128xf32, #tpu.memory_space<vmem>>, vector<10x10x128xf32>,
    %c0_2 = arith.constant 0 : index
    %c0_3 = arith.constant 0 : index
    %c0_4 = arith.constant 0 : index
    %c0_5 = arith.constant 0 : index
    %2 = vector.load %arg1[%c0_2, %c0_3, %c0_4, %c0_5] : memref<1x8x8x128xf32, #tpu.memory_space<vmem>>, vector<1x8x8x128xf32>
    %3 = vector.shape_cast %2 : vector<1x8x8x128xf32> to vector<8x8x128xf32>
    %c0_6 = arith.constant 0 : index
    %c0_7 = arith.constant 0 : index
    %4 = vector.load %arg2[%c0_6, %c0_7] : memref<1x128xf32, #tpu.memory_space<vmem>>, vector<1x128xf32>
    %5 = vector.shape_cast %4 : vector<1x128xf32> to vector<1x1x128xf32>
    %6 = vector.broadcast %5 : vector<1x1x128xf32> to vector<8x8x128xf32>
    %7 = arith.mulf %3, %6 : vector<8x8x128xf32>
    %c0_8 = arith.constant 0 : index
    %c0_9 = arith.constant 0 : index
    %8 = vector.load %arg3[%c0_8, %c0_9] : memref<1x128xf32, #tpu.memory_space<vmem>>, vector<1x128xf32>
    %9 = vector.shape_cast %8 : vector<1x128xf32> to vector<1x1x128xf32>
    %10 = vector.broadcast %9 : vector<1x1x128xf32> to vector<8x8x128xf32>
    %11 = arith.addf %7, %10 : vector<8x8x128xf32>
    %cst_10 = arith.constant 0.000000e+00 : f32
    %12 = vector.broadcast %cst_10 : f32 to vector<8x8x128xf32>
    %13 = arith.maximumf %11, %12 : vector<8x8x128xf32>
    %c1 = arith.constant 1 : index
    %c1_11 = arith.constant 1 : index
    %c0_12 = arith.constant 0 : index
    %14 = vector.load %arg10[%c1, %c1_11, %c0_12] : memref<10x10x128xf32, #tpu.memory_space<vmem>>, vector<8x8x128xf32>
    tpu.vector_store %arg10[%c1, %c1_11, %c0_12], %13 {strides = array<i32>} : memref<10x10x128xf32, #tpu.memory_space<vmem>>, vector<8x8x128xf32>,
    %cst_13 = arith.constant 0.000000e+00 : f32
    %15 = vector.broadcast %cst_13 : f32 to vector<64x128xf32>
    %c0_14 = arith.constant 0 : index
    %c0_15 = arith.constant 0 : index
    %c0_16 = arith.constant 0 : index
    %16 = vector.load %arg10[%c0_14, %c0_15, %c0_16] : memref<10x10x128xf32, #tpu.memory_space<vmem>>, vector<8x8x128xf32>
    %17 = vector.shape_cast %16 : vector<8x8x128xf32> to vector<64x128xf32>
    %18 = arith.truncf %17 : vector<64x128xf32> to vector<64x128xbf16>
    %c0_17 = arith.constant 0 : index
    %c0_18 = arith.constant 0 : index
    %c0_19 = arith.constant 0 : index
    %19 = vector.load %arg4[%c0_17, %c0_18, %c0_19] : memref<4x128x128xbf16, #tpu.memory_space<vmem>>, vector<1x128x128xbf16>
    %20 = vector.shape_cast %19 : vector<1x128x128xbf16> to vector<128x128xbf16>
    %cst_20 = arith.constant dense<0.000000e+00> : vector<64x128xf32>
    %21 = tpu.matmul %18, %20, %cst_20 {dimension_numbers = #tpu.dot_dimension_numbers<[1], [0], [0], [1], [0, 0, 1, 1], [], []>} : vector<64x128xbf16>, vector<128x128xbf16>, vector<64x128xf32> -> vector<64x128xf32>
    %22 = arith.addf %15, %21 : vector<64x128xf32>
    %c0_21 = arith.constant 0 : index
    %c1_22 = arith.constant 1 : index
    %c0_23 = arith.constant 0 : index
    %23 = vector.load %arg10[%c0_21, %c1_22, %c0_23] : memref<10x10x128xf32, #tpu.memory_space<vmem>>, vector<8x8x128xf32>
    %24 = vector.shape_cast %23 : vector<8x8x128xf32> to vector<64x128xf32>
    %25 = arith.truncf %24 : vector<64x128xf32> to vector<64x128xbf16>
    %c1_24 = arith.constant 1 : index
    %c0_25 = arith.constant 0 : index
    %c0_26 = arith.constant 0 : index
    %26 = vector.load %arg4[%c1_24, %c0_25, %c0_26] : memref<4x128x128xbf16, #tpu.memory_space<vmem>>, vector<1x128x128xbf16>
    %27 = vector.shape_cast %26 : vector<1x128x128xbf16> to vector<128x128xbf16>
    %cst_27 = arith.constant dense<0.000000e+00> : vector<64x128xf32>
    %28 = tpu.matmul %25, %27, %cst_27 {dimension_numbers = #tpu.dot_dimension_numbers<[1], [0], [0], [1], [0, 0, 1, 1], [], []>} : vector<64x128xbf16>, vector<128x128xbf16>, vector<64x128xf32> -> vector<64x128xf32>
    %29 = arith.addf %22, %28 : vector<64x128xf32>
    %c1_28 = arith.constant 1 : index
    %c0_29 = arith.constant 0 : index
    %c0_30 = arith.constant 0 : index
    %30 = vector.load %arg10[%c1_28, %c0_29, %c0_30] : memref<10x10x128xf32, #tpu.memory_space<vmem>>, vector<8x8x128xf32>
    %31 = vector.shape_cast %30 : vector<8x8x128xf32> to vector<64x128xf32>
    %32 = arith.truncf %31 : vector<64x128xf32> to vector<64x128xbf16>
    %c2 = arith.constant 2 : index
    %c0_31 = arith.constant 0 : index
    %c0_32 = arith.constant 0 : index
    %33 = vector.load %arg4[%c2, %c0_31, %c0_32] : memref<4x128x128xbf16, #tpu.memory_space<vmem>>, vector<1x128x128xbf16>
    %34 = vector.shape_cast %33 : vector<1x128x128xbf16> to vector<128x128xbf16>
    %cst_33 = arith.constant dense<0.000000e+00> : vector<64x128xf32>
    %35 = tpu.matmul %32, %34, %cst_33 {dimension_numbers = #tpu.dot_dimension_numbers<[1], [0], [0], [1], [0, 0, 1, 1], [], []>} : vector<64x128xbf16>, vector<128x128xbf16>, vector<64x128xf32> -> vector<64x128xf32>
    %36 = arith.addf %29, %35 : vector<64x128xf32>
    %c1_34 = arith.constant 1 : index
    %c1_35 = arith.constant 1 : index
    %c0_36 = arith.constant 0 : index
    %37 = vector.load %arg10[%c1_34, %c1_35, %c0_36] : memref<10x10x128xf32, #tpu.memory_space<vmem>>, vector<8x8x128xf32>
    %38 = vector.shape_cast %37 : vector<8x8x128xf32> to vector<64x128xf32>
    %39 = arith.truncf %38 : vector<64x128xf32> to vector<64x128xbf16>
    %c3 = arith.constant 3 : index
    %c0_37 = arith.constant 0 : index
    %c0_38 = arith.constant 0 : index
    %40 = vector.load %arg4[%c3, %c0_37, %c0_38] : memref<4x128x128xbf16, #tpu.memory_space<vmem>>, vector<1x128x128xbf16>
    %41 = vector.shape_cast %40 : vector<1x128x128xbf16> to vector<128x128xbf16>
    %cst_39 = arith.constant dense<0.000000e+00> : vector<64x128xf32>
    %42 = tpu.matmul %39, %41, %cst_39 {dimension_numbers = #tpu.dot_dimension_numbers<[1], [0], [0], [1], [0, 0, 1, 1], [], []>} : vector<64x128xbf16>, vector<128x128xbf16>, vector<64x128xf32> -> vector<64x128xf32>
    %43 = arith.addf %36, %42 : vector<64x128xf32>
    %c0_40 = arith.constant 0 : index
    %c0_41 = arith.constant 0 : index
    %44 = vector.load %arg5[%c0_40, %c0_41] : memref<1x128xf32, #tpu.memory_space<vmem>>, vector<1x128xf32>
    %45 = vector.broadcast %44 : vector<1x128xf32> to vector<64x128xf32>
    %46 = arith.mulf %43, %45 : vector<64x128xf32>
    %c0_42 = arith.constant 0 : index
    %c0_43 = arith.constant 0 : index
    %47 = vector.load %arg6[%c0_42, %c0_43] : memref<1x128xf32, #tpu.memory_space<vmem>>, vector<1x128xf32>
    %48 = vector.broadcast %47 : vector<1x128xf32> to vector<64x128xf32>
    %49 = arith.addf %46, %48 : vector<64x128xf32>
    %cst_44 = arith.constant 0.000000e+00 : f32
    %50 = vector.broadcast %cst_44 : f32 to vector<64x128xf32>
    %51 = arith.maximumf %49, %50 : vector<64x128xf32>
    %52 = vector.shape_cast %51 : vector<64x128xf32> to vector<8x8x128xf32>
    %53 = arith.truncf %52 : vector<8x8x128xf32> to vector<8x8x128xbf16>
    %c0_45 = arith.constant 0 : index
    %c0_46 = arith.constant 0 : index
    %c0_47 = arith.constant 0 : index
    %c0_48 = arith.constant 0 : index
    %54 = vector.load %arg8[%c0_45, %c0_46, %c0_47, %c0_48] : memref<1x8x8x128xbf16, #tpu.memory_space<vmem>>, vector<1x8x8x128xbf16>
    %55 = vector.shape_cast %54 : vector<1x8x8x128xbf16> to vector<8x8x128xbf16>
    %56 = vector.shape_cast %53 : vector<8x8x128xbf16> to vector<1x8x8x128xbf16>
    tpu.vector_store %arg8[%c0_45, %c0_46, %c0_47, %c0_48], %56 {strides = array<i32>} : memref<1x8x8x128xbf16, #tpu.memory_space<vmem>>, vector<1x8x8x128xbf16>,
    %c1_49 = arith.constant 1 : index
    %c1_50 = arith.constant 1 : index
    %c0_51 = arith.constant 0 : index
    %57 = vector.load %arg10[%c1_49, %c1_50, %c0_51] : memref<10x10x128xf32, #tpu.memory_space<vmem>>, vector<8x8x128xf32>
    %58 = vector.shape_cast %57 : vector<8x8x128xf32> to vector<64x128xf32>
    %59 = arith.truncf %58 : vector<64x128xf32> to vector<64x128xbf16>
    %c0_52 = arith.constant 0 : index
    %c0_53 = arith.constant 0 : index
    %60 = vector.load %arg7[%c0_52, %c0_53] : memref<128x128xbf16, #tpu.memory_space<vmem>>, vector<128x128xbf16>
    %cst_54 = arith.constant dense<0.000000e+00> : vector<64x128xf32>
    %61 = tpu.matmul %59, %60, %cst_54 {dimension_numbers = #tpu.dot_dimension_numbers<[1], [0], [0], [1], [0, 0, 1, 1], [], []>} : vector<64x128xbf16>, vector<128x128xbf16>, vector<64x128xf32> -> vector<64x128xf32>
    %62 = vector.shape_cast %61 : vector<64x128xf32> to vector<8x8x128xf32>
    %c0_55 = arith.constant 0 : index
    %c0_56 = arith.constant 0 : index
    %c0_57 = arith.constant 0 : index
    %c0_58 = arith.constant 0 : index
    %63 = vector.load %arg9[%c0_55, %c0_56, %c0_57, %c0_58] : memref<1x8x8x128xf32, #tpu.memory_space<vmem>>, vector<1x8x8x128xf32>
    %64 = vector.shape_cast %63 : vector<1x8x8x128xf32> to vector<8x8x128xf32>
    %65 = vector.shape_cast %62 : vector<8x8x128xf32> to vector<1x8x8x128xf32>
    tpu.vector_store %arg9[%c0_55, %c0_56, %c0_57, %c0_58], %65 {strides = array<i32>} : memref<1x8x8x128xf32, #tpu.memory_space<vmem>>, vector<1x8x8x128xf32>,
    return
  }
  func.func @transform_0(%arg0: i32) -> (i32, i32, i32, i32) {
    %c0_i32 = arith.constant 0 : i32
    %c0_i32_0 = arith.constant 0 : i32
    %c0_i32_1 = arith.constant 0 : i32
    %c0_i32_2 = arith.constant 0 : i32
    return %arg0, %c0_i32, %c0_i32_0, %c0_i32_1 : i32, i32, i32, i32
  }
  func.func @transform_1(%arg0: i32) -> (i32, i32) {
    %c0_i32 = arith.constant 0 : i32
    %c0_i32_0 = arith.constant 0 : i32
    %c0_i32_1 = arith.constant 0 : i32
    return %c0_i32, %c0_i32_0 : i32, i32
  }
  func.func @transform_2(%arg0: i32) -> (i32, i32) {
    %c0_i32 = arith.constant 0 : i32
    %c0_i32_0 = arith.constant 0 : i32
    %c0_i32_1 = arith.constant 0 : i32
    return %c0_i32, %c0_i32_0 : i32, i32
  }
  func.func @transform_3(%arg0: i32) -> (i32, i32, i32) {
    %c0_i32 = arith.constant 0 : i32
    %c0_i32_0 = arith.constant 0 : i32
    %c0_i32_1 = arith.constant 0 : i32
    %c0_i32_2 = arith.constant 0 : i32
    return %c0_i32, %c0_i32_0, %c0_i32_1 : i32, i32, i32
  }
  func.func @transform_4(%arg0: i32) -> (i32, i32) {
    %c0_i32 = arith.constant 0 : i32
    %c0_i32_0 = arith.constant 0 : i32
    %c0_i32_1 = arith.constant 0 : i32
    return %c0_i32, %c0_i32_0 : i32, i32
  }
  func.func @transform_5(%arg0: i32) -> (i32, i32) {
    %c0_i32 = arith.constant 0 : i32
    %c0_i32_0 = arith.constant 0 : i32
    %c0_i32_1 = arith.constant 0 : i32
    return %c0_i32, %c0_i32_0 : i32, i32
  }
  func.func @transform_6(%arg0: i32) -> (i32, i32) {
    %c0_i32 = arith.constant 0 : i32
    %c0_i32_0 = arith.constant 0 : i32
    %c0_i32_1 = arith.constant 0 : i32
    return %c0_i32, %c0_i32_0 : i32, i32
  }
  func.func @transform_7(%arg0: i32) -> (i32, i32, i32, i32) {
    %c0_i32 = arith.constant 0 : i32
    %c0_i32_0 = arith.constant 0 : i32
    %c0_i32_1 = arith.constant 0 : i32
    %c0_i32_2 = arith.constant 0 : i32
    return %arg0, %c0_i32, %c0_i32_0, %c0_i32_1 : i32, i32, i32, i32
  }
  func.func @transform_8(%arg0: i32) -> (i32, i32, i32, i32) {
    %c0_i32 = arith.constant 0 : i32
    %c0_i32_0 = arith.constant 0 : i32
    %c0_i32_1 = arith.constant 0 : i32
    %c0_i32_2 = arith.constant 0 : i32
    return %arg0, %c0_i32, %c0_i32_0, %c0_i32_1 : i32, i32, i32, i32
  }
}

module attributes {stable_mosaic.version = 11 : i64} {
  func.func @kernel(%arg0: i32, %arg1: memref<1x8x8x128xbf16, #tpu.memory_space<vmem>>, %arg2: memref<9x128x128xbf16, #tpu.memory_space<vmem>>, %arg3: memref<1x8x8x128xf32, #tpu.memory_space<vmem>>, %arg4: memref<1x8x8x128xf32, #tpu.memory_space<vmem>>, %arg5: memref<10x10x128xf32, #tpu.memory_space<vmem>>) attributes {dimension_semantics = [#tpu.dimension_semantics<parallel>], iteration_bounds = array<i64: 2>, scalar_prefetch = 0 : i64, scratch_operands = 1 : i64, tpu.core_type = #tpu.core_type<tc>, window_params = [{transform_indices = @transform_0, window_bounds = array<i64: 1, 8, 8, 128>}, {pipeline_mode = #tpu.pipeline_mode<synchronous>, transform_indices = @transform_1, window_bounds = array<i64: 9, 128, 128>}, {transform_indices = @transform_2, window_bounds = array<i64: 1, 8, 8, 128>}, {transform_indices = @transform_3, window_bounds = array<i64: 1, 8, 8, 128>}]} {
    %cst = arith.constant 0.000000e+00 : f32
    %0 = vector.broadcast %cst : f32 to vector<10x10x128xf32>
    %c0 = arith.constant 0 : index
    %c0_0 = arith.constant 0 : index
    %c0_1 = arith.constant 0 : index
    %1 = vector.load %arg5[%c0, %c0_0, %c0_1] : memref<10x10x128xf32, #tpu.memory_space<vmem>>, vector<10x10x128xf32>
    tpu.vector_store %arg5[%c0, %c0_0, %c0_1], %0 {strides = array<i32>} : memref<10x10x128xf32, #tpu.memory_space<vmem>>, vector<10x10x128xf32>,
    %c0_2 = arith.constant 0 : index
    %c0_3 = arith.constant 0 : index
    %c0_4 = arith.constant 0 : index
    %c0_5 = arith.constant 0 : index
    %2 = vector.load %arg1[%c0_2, %c0_3, %c0_4, %c0_5] : memref<1x8x8x128xbf16, #tpu.memory_space<vmem>>, vector<1x8x8x128xbf16>
    %3 = vector.shape_cast %2 : vector<1x8x8x128xbf16> to vector<8x8x128xbf16>
    %4 = arith.extf %3 : vector<8x8x128xbf16> to vector<8x8x128xf32>
    %c1 = arith.constant 1 : index
    %c1_6 = arith.constant 1 : index
    %c0_7 = arith.constant 0 : index
    %5 = vector.load %arg5[%c1, %c1_6, %c0_7] : memref<10x10x128xf32, #tpu.memory_space<vmem>>, vector<8x8x128xf32>
    tpu.vector_store %arg5[%c1, %c1_6, %c0_7], %4 {strides = array<i32>} : memref<10x10x128xf32, #tpu.memory_space<vmem>>, vector<8x8x128xf32>,
    %cst_8 = arith.constant 0.000000e+00 : f32
    %6 = vector.broadcast %cst_8 : f32 to vector<64x128xf32>
    %c0_9 = arith.constant 0 : index
    %c0_10 = arith.constant 0 : index
    %c0_11 = arith.constant 0 : index
    %7 = vector.load %arg5[%c0_9, %c0_10, %c0_11] : memref<10x10x128xf32, #tpu.memory_space<vmem>>, vector<8x8x128xf32>
    %8 = vector.shape_cast %7 : vector<8x8x128xf32> to vector<64x128xf32>
    %9 = arith.truncf %8 : vector<64x128xf32> to vector<64x128xbf16>
    %c0_12 = arith.constant 0 : index
    %c0_13 = arith.constant 0 : index
    %c0_14 = arith.constant 0 : index
    %10 = vector.load %arg2[%c0_12, %c0_13, %c0_14] : memref<9x128x128xbf16, #tpu.memory_space<vmem>>, vector<1x128x128xbf16>
    %11 = vector.shape_cast %10 : vector<1x128x128xbf16> to vector<128x128xbf16>
    %cst_15 = arith.constant dense<0.000000e+00> : vector<64x128xf32>
    %12 = tpu.matmul %9, %11, %cst_15 {dimension_numbers = #tpu.dot_dimension_numbers<[1], [0], [0], [1], [0, 0, 1, 1], [], []>} : vector<64x128xbf16>, vector<128x128xbf16>, vector<64x128xf32> -> vector<64x128xf32>
    %13 = arith.addf %6, %12 : vector<64x128xf32>
    %c0_16 = arith.constant 0 : index
    %c1_17 = arith.constant 1 : index
    %c0_18 = arith.constant 0 : index
    %14 = vector.load %arg5[%c0_16, %c1_17, %c0_18] : memref<10x10x128xf32, #tpu.memory_space<vmem>>, vector<8x8x128xf32>
    %15 = vector.shape_cast %14 : vector<8x8x128xf32> to vector<64x128xf32>
    %16 = arith.truncf %15 : vector<64x128xf32> to vector<64x128xbf16>
    %c1_19 = arith.constant 1 : index
    %c0_20 = arith.constant 0 : index
    %c0_21 = arith.constant 0 : index
    %17 = vector.load %arg2[%c1_19, %c0_20, %c0_21] : memref<9x128x128xbf16, #tpu.memory_space<vmem>>, vector<1x128x128xbf16>
    %18 = vector.shape_cast %17 : vector<1x128x128xbf16> to vector<128x128xbf16>
    %cst_22 = arith.constant dense<0.000000e+00> : vector<64x128xf32>
    %19 = tpu.matmul %16, %18, %cst_22 {dimension_numbers = #tpu.dot_dimension_numbers<[1], [0], [0], [1], [0, 0, 1, 1], [], []>} : vector<64x128xbf16>, vector<128x128xbf16>, vector<64x128xf32> -> vector<64x128xf32>
    %20 = arith.addf %13, %19 : vector<64x128xf32>
    %c0_23 = arith.constant 0 : index
    %c2 = arith.constant 2 : index
    %c0_24 = arith.constant 0 : index
    %21 = vector.load %arg5[%c0_23, %c2, %c0_24] : memref<10x10x128xf32, #tpu.memory_space<vmem>>, vector<8x8x128xf32>
    %22 = vector.shape_cast %21 : vector<8x8x128xf32> to vector<64x128xf32>
    %23 = arith.truncf %22 : vector<64x128xf32> to vector<64x128xbf16>
    %c2_25 = arith.constant 2 : index
    %c0_26 = arith.constant 0 : index
    %c0_27 = arith.constant 0 : index
    %24 = vector.load %arg2[%c2_25, %c0_26, %c0_27] : memref<9x128x128xbf16, #tpu.memory_space<vmem>>, vector<1x128x128xbf16>
    %25 = vector.shape_cast %24 : vector<1x128x128xbf16> to vector<128x128xbf16>
    %cst_28 = arith.constant dense<0.000000e+00> : vector<64x128xf32>
    %26 = tpu.matmul %23, %25, %cst_28 {dimension_numbers = #tpu.dot_dimension_numbers<[1], [0], [0], [1], [0, 0, 1, 1], [], []>} : vector<64x128xbf16>, vector<128x128xbf16>, vector<64x128xf32> -> vector<64x128xf32>
    %27 = arith.addf %20, %26 : vector<64x128xf32>
    %c1_29 = arith.constant 1 : index
    %c0_30 = arith.constant 0 : index
    %c0_31 = arith.constant 0 : index
    %28 = vector.load %arg5[%c1_29, %c0_30, %c0_31] : memref<10x10x128xf32, #tpu.memory_space<vmem>>, vector<8x8x128xf32>
    %29 = vector.shape_cast %28 : vector<8x8x128xf32> to vector<64x128xf32>
    %30 = arith.truncf %29 : vector<64x128xf32> to vector<64x128xbf16>
    %c3 = arith.constant 3 : index
    %c0_32 = arith.constant 0 : index
    %c0_33 = arith.constant 0 : index
    %31 = vector.load %arg2[%c3, %c0_32, %c0_33] : memref<9x128x128xbf16, #tpu.memory_space<vmem>>, vector<1x128x128xbf16>
    %32 = vector.shape_cast %31 : vector<1x128x128xbf16> to vector<128x128xbf16>
    %cst_34 = arith.constant dense<0.000000e+00> : vector<64x128xf32>
    %33 = tpu.matmul %30, %32, %cst_34 {dimension_numbers = #tpu.dot_dimension_numbers<[1], [0], [0], [1], [0, 0, 1, 1], [], []>} : vector<64x128xbf16>, vector<128x128xbf16>, vector<64x128xf32> -> vector<64x128xf32>
    %34 = arith.addf %27, %33 : vector<64x128xf32>
    %c1_35 = arith.constant 1 : index
    %c1_36 = arith.constant 1 : index
    %c0_37 = arith.constant 0 : index
    %35 = vector.load %arg5[%c1_35, %c1_36, %c0_37] : memref<10x10x128xf32, #tpu.memory_space<vmem>>, vector<8x8x128xf32>
    %36 = vector.shape_cast %35 : vector<8x8x128xf32> to vector<64x128xf32>
    %37 = arith.truncf %36 : vector<64x128xf32> to vector<64x128xbf16>
    %c4 = arith.constant 4 : index
    %c0_38 = arith.constant 0 : index
    %c0_39 = arith.constant 0 : index
    %38 = vector.load %arg2[%c4, %c0_38, %c0_39] : memref<9x128x128xbf16, #tpu.memory_space<vmem>>, vector<1x128x128xbf16>
    %39 = vector.shape_cast %38 : vector<1x128x128xbf16> to vector<128x128xbf16>
    %cst_40 = arith.constant dense<0.000000e+00> : vector<64x128xf32>
    %40 = tpu.matmul %37, %39, %cst_40 {dimension_numbers = #tpu.dot_dimension_numbers<[1], [0], [0], [1], [0, 0, 1, 1], [], []>} : vector<64x128xbf16>, vector<128x128xbf16>, vector<64x128xf32> -> vector<64x128xf32>
    %41 = arith.addf %34, %40 : vector<64x128xf32>
    %c1_41 = arith.constant 1 : index
    %c2_42 = arith.constant 2 : index
    %c0_43 = arith.constant 0 : index
    %42 = vector.load %arg5[%c1_41, %c2_42, %c0_43] : memref<10x10x128xf32, #tpu.memory_space<vmem>>, vector<8x8x128xf32>
    %43 = vector.shape_cast %42 : vector<8x8x128xf32> to vector<64x128xf32>
    %44 = arith.truncf %43 : vector<64x128xf32> to vector<64x128xbf16>
    %c5 = arith.constant 5 : index
    %c0_44 = arith.constant 0 : index
    %c0_45 = arith.constant 0 : index
    %45 = vector.load %arg2[%c5, %c0_44, %c0_45] : memref<9x128x128xbf16, #tpu.memory_space<vmem>>, vector<1x128x128xbf16>
    %46 = vector.shape_cast %45 : vector<1x128x128xbf16> to vector<128x128xbf16>
    %cst_46 = arith.constant dense<0.000000e+00> : vector<64x128xf32>
    %47 = tpu.matmul %44, %46, %cst_46 {dimension_numbers = #tpu.dot_dimension_numbers<[1], [0], [0], [1], [0, 0, 1, 1], [], []>} : vector<64x128xbf16>, vector<128x128xbf16>, vector<64x128xf32> -> vector<64x128xf32>
    %48 = arith.addf %41, %47 : vector<64x128xf32>
    %c2_47 = arith.constant 2 : index
    %c0_48 = arith.constant 0 : index
    %c0_49 = arith.constant 0 : index
    %49 = vector.load %arg5[%c2_47, %c0_48, %c0_49] : memref<10x10x128xf32, #tpu.memory_space<vmem>>, vector<8x8x128xf32>
    %50 = vector.shape_cast %49 : vector<8x8x128xf32> to vector<64x128xf32>
    %51 = arith.truncf %50 : vector<64x128xf32> to vector<64x128xbf16>
    %c6 = arith.constant 6 : index
    %c0_50 = arith.constant 0 : index
    %c0_51 = arith.constant 0 : index
    %52 = vector.load %arg2[%c6, %c0_50, %c0_51] : memref<9x128x128xbf16, #tpu.memory_space<vmem>>, vector<1x128x128xbf16>
    %53 = vector.shape_cast %52 : vector<1x128x128xbf16> to vector<128x128xbf16>
    %cst_52 = arith.constant dense<0.000000e+00> : vector<64x128xf32>
    %54 = tpu.matmul %51, %53, %cst_52 {dimension_numbers = #tpu.dot_dimension_numbers<[1], [0], [0], [1], [0, 0, 1, 1], [], []>} : vector<64x128xbf16>, vector<128x128xbf16>, vector<64x128xf32> -> vector<64x128xf32>
    %55 = arith.addf %48, %54 : vector<64x128xf32>
    %c2_53 = arith.constant 2 : index
    %c1_54 = arith.constant 1 : index
    %c0_55 = arith.constant 0 : index
    %56 = vector.load %arg5[%c2_53, %c1_54, %c0_55] : memref<10x10x128xf32, #tpu.memory_space<vmem>>, vector<8x8x128xf32>
    %57 = vector.shape_cast %56 : vector<8x8x128xf32> to vector<64x128xf32>
    %58 = arith.truncf %57 : vector<64x128xf32> to vector<64x128xbf16>
    %c7 = arith.constant 7 : index
    %c0_56 = arith.constant 0 : index
    %c0_57 = arith.constant 0 : index
    %59 = vector.load %arg2[%c7, %c0_56, %c0_57] : memref<9x128x128xbf16, #tpu.memory_space<vmem>>, vector<1x128x128xbf16>
    %60 = vector.shape_cast %59 : vector<1x128x128xbf16> to vector<128x128xbf16>
    %cst_58 = arith.constant dense<0.000000e+00> : vector<64x128xf32>
    %61 = tpu.matmul %58, %60, %cst_58 {dimension_numbers = #tpu.dot_dimension_numbers<[1], [0], [0], [1], [0, 0, 1, 1], [], []>} : vector<64x128xbf16>, vector<128x128xbf16>, vector<64x128xf32> -> vector<64x128xf32>
    %62 = arith.addf %55, %61 : vector<64x128xf32>
    %c2_59 = arith.constant 2 : index
    %c2_60 = arith.constant 2 : index
    %c0_61 = arith.constant 0 : index
    %63 = vector.load %arg5[%c2_59, %c2_60, %c0_61] : memref<10x10x128xf32, #tpu.memory_space<vmem>>, vector<8x8x128xf32>
    %64 = vector.shape_cast %63 : vector<8x8x128xf32> to vector<64x128xf32>
    %65 = arith.truncf %64 : vector<64x128xf32> to vector<64x128xbf16>
    %c8 = arith.constant 8 : index
    %c0_62 = arith.constant 0 : index
    %c0_63 = arith.constant 0 : index
    %66 = vector.load %arg2[%c8, %c0_62, %c0_63] : memref<9x128x128xbf16, #tpu.memory_space<vmem>>, vector<1x128x128xbf16>
    %67 = vector.shape_cast %66 : vector<1x128x128xbf16> to vector<128x128xbf16>
    %cst_64 = arith.constant dense<0.000000e+00> : vector<64x128xf32>
    %68 = tpu.matmul %65, %67, %cst_64 {dimension_numbers = #tpu.dot_dimension_numbers<[1], [0], [0], [1], [0, 0, 1, 1], [], []>} : vector<64x128xbf16>, vector<128x128xbf16>, vector<64x128xf32> -> vector<64x128xf32>
    %69 = arith.addf %62, %68 : vector<64x128xf32>
    %70 = vector.shape_cast %69 : vector<64x128xf32> to vector<8x8x128xf32>
    %c0_65 = arith.constant 0 : index
    %c0_66 = arith.constant 0 : index
    %c0_67 = arith.constant 0 : index
    %c0_68 = arith.constant 0 : index
    %71 = vector.load %arg3[%c0_65, %c0_66, %c0_67, %c0_68] : memref<1x8x8x128xf32, #tpu.memory_space<vmem>>, vector<1x8x8x128xf32>
    %72 = vector.shape_cast %71 : vector<1x8x8x128xf32> to vector<8x8x128xf32>
    %73 = arith.addf %70, %72 : vector<8x8x128xf32>
    %c0_69 = arith.constant 0 : index
    %c0_70 = arith.constant 0 : index
    %c0_71 = arith.constant 0 : index
    %c0_72 = arith.constant 0 : index
    %74 = vector.load %arg4[%c0_69, %c0_70, %c0_71, %c0_72] : memref<1x8x8x128xf32, #tpu.memory_space<vmem>>, vector<1x8x8x128xf32>
    %75 = vector.shape_cast %74 : vector<1x8x8x128xf32> to vector<8x8x128xf32>
    %76 = vector.shape_cast %73 : vector<8x8x128xf32> to vector<1x8x8x128xf32>
    tpu.vector_store %arg4[%c0_69, %c0_70, %c0_71, %c0_72], %76 {strides = array<i32>} : memref<1x8x8x128xf32, #tpu.memory_space<vmem>>, vector<1x8x8x128xf32>,
    return
  }
  func.func @transform_0(%arg0: i32) -> (i32, i32, i32, i32) {
    %c0_i32 = arith.constant 0 : i32
    %c0_i32_0 = arith.constant 0 : i32
    %c0_i32_1 = arith.constant 0 : i32
    %c0_i32_2 = arith.constant 0 : i32
    return %arg0, %c0_i32, %c0_i32_0, %c0_i32_1 : i32, i32, i32, i32
  }
  func.func @transform_1(%arg0: i32) -> (i32, i32, i32) {
    %c0_i32 = arith.constant 0 : i32
    %c0_i32_0 = arith.constant 0 : i32
    %c0_i32_1 = arith.constant 0 : i32
    %c0_i32_2 = arith.constant 0 : i32
    return %c0_i32, %c0_i32_0, %c0_i32_1 : i32, i32, i32
  }
  func.func @transform_2(%arg0: i32) -> (i32, i32, i32, i32) {
    %c0_i32 = arith.constant 0 : i32
    %c0_i32_0 = arith.constant 0 : i32
    %c0_i32_1 = arith.constant 0 : i32
    %c0_i32_2 = arith.constant 0 : i32
    return %arg0, %c0_i32, %c0_i32_0, %c0_i32_1 : i32, i32, i32, i32
  }
  func.func @transform_3(%arg0: i32) -> (i32, i32, i32, i32) {
    %c0_i32 = arith.constant 0 : i32
    %c0_i32_0 = arith.constant 0 : i32
    %c0_i32_1 = arith.constant 0 : i32
    %c0_i32_2 = arith.constant 0 : i32
    return %arg0, %c0_i32, %c0_i32_0, %c0_i32_1 : i32, i32, i32, i32
  }
}

</mosaic_0001>

<llo_original>
// kernel: tile.13
$region0: #{tile.13}
  #allocation0 [shape = 's32[1]{0}', space=sflag, size = 0x4, scoped, tag = 'scoped memory for tile.13']
  %s0 = inlined_call_operand.vmem [shape: f32[16], index: 0, kind: input, shape index: {}]
  %s1 = inlined_call_operand.vmem [shape: f32[4,16], index: 1, kind: output, shape index: {}]
  // Predicated region
  $region2: #{tile.13} parent=0 // pred_check
    _
  $region3: #{tile.13} parent=0 // pred_check_branch
    %3 = sbr.rel (0) target = $region5
  $region4: #{tile.13} parent=0 // pred_region
    _
  $region5: #{tile.13} parent=0 // pred_fallthru
    _
  %v4 = vld [vmem:[%s0] ss:$0 sm:$0xff]
  %5 = vst [vmem:[%s1] sm:$0xf] %v4

// kernel: tile.14
$region0: #{tile.14}
  %s0 = inlined_call_operand.vmem [shape: f32[4,16], index: 0, kind: input, shape index: {}]
  %s1 = inlined_call_operand.vmem [shape: f32[64], index: 1, kind: output, shape index: {}]
  $region1: #{tile.14} parent=0
    #allocation0 [shape = 'u8[4096]{0}', space=vmem, size = 0x1000, scoped, tag = 'scoped mem for output reshape']
    #allocation1 [shape = 'u8[4096]{0}', space=vmem, size = 0x1000, scoped, tag = 'scoped mem for input reshape']
    %s3 = ssub.s32 16, 1
    %v4 = vld [vmem:[%s0] sm:%s3]
    %5 = vst [vmem:[#allocation1] sm:%s3] %v4
    %v6 = vld [vmem:[#allocation1] sm:$0x1]
    %vm7 = vcmask 130048
    %8 = vst.msk [vmem:[#allocation0] sm:$0x1] %vm7, %v6
    %s9 = scalar_lea.vmem [#allocation1], 3
    %v10 = vld [vmem:[%s9] sm:$0x1]
    %11 = vrot.lane.b32.xlu0 %v10, 48
    %v12 = vpop.permute.xlu0 %11
    %vm13 = vcmask 523648
    %14 = vst.msk [vmem:[#allocation0] sm:$0x1] %vm13, %v12
    %s15 = scalar_lea.vmem [#allocation1], 2
    %v16 = vld [vmem:[%s15] sm:$0x1]
    %17 = vrot.lane.b32.xlu0 %v16, 32
    %v18 = vpop.permute.xlu0 %17
    %vm19 = vcmask 392448
    %20 = vst.msk [vmem:[#allocation0] sm:$0x1] %vm19, %v18
    %s21 = scalar_lea.vmem [#allocation1], 1
    %v22 = vld [vmem:[%s21] sm:$0x1]
    %23 = vrot.lane.b32.xlu0 %v22, 16
    %v24 = vpop.permute.xlu0 %23
    %vm25 = vcmask 261248
    %26 = vst.msk [vmem:[#allocation0] sm:$0x1] %vm25, %v24
    %s28 = ssub.s32 2, 1
    %v29 = vld [vmem:[#allocation0] sm:%s28]
    %s31 = ssub.s32 2, 1
    %32 = vst [vmem:[%s1] sm:%s31] %v29

// kernel: basic_block_forward.2
$region0: #{basic_block_forward.2}
  #allocation0 [shape = 'u32[]', space=smem, size = 0x4, offset = 0x4, fixed_abs, tag = 'smem constant byte address 0x4 - core index']
  #allocation1 [shape = 'u32[72,128]{1,0:T(1,128)}', space=vmem, size = 0x9000, scoped, tag = 'internal scratch']
  #allocation2 [shape = 'f32[10,10,128]{2,1,0:T(8,128)}', space=vmem, size = 0x14000, scoped, tag = 'scratch operand']
  %s0 = inlined_call_operand.vmem [shape: f32[2,8,8,128], index: 0, kind: input, shape index: {}]
  %s1 = inlined_call_operand.vmem [shape: f32[1,128], index: 1, kind: input, shape index: {}]
  %s2 = inlined_call_operand.vmem [shape: f32[1,128], index: 2, kind: input, shape index: {}]
  %s3 = inlined_call_operand.vmem [shape: bf16[4,128,128], index: 3, kind: input, shape index: {}]
  %s4 = inlined_call_operand.vmem [shape: f32[1,128], index: 4, kind: input, shape index: {}]
  %s5 = inlined_call_operand.vmem [shape: f32[1,128], index: 5, kind: input, shape index: {}]
  %s6 = inlined_call_operand.vmem [shape: bf16[128,128], index: 6, kind: input, shape index: {}]
  %s7 = inlined_call_operand.vmem [shape: bf16[2,8,8,128], index: 7, kind: output, shape index: {0}]
  %s8 = inlined_call_operand.vmem [shape: f32[2,8,8,128], index: 8, kind: output, shape index: {1}]
  %9 = xla_tuple %s7, %s8
  %s10 = sld [smem:[#allocation0]]
  $region69: #{basic_block_forward.2} parent=0
    _
  %s12 = ssub.s32 1, %s10
  %s13 = scalar_select 0, %s12, %s10
  loop: start=0, step=1, limit=4
  $region2: #{basic_block_forward.2} parent=0 // loop_pre_header
    _
  $region3: #{basic_block_forward.2} parent=0 // loop_header
    %s15 = sphi 0, %s19
    %p16 = scmp.ge.s32.totalorder %s15, 4
    %s25 = sphi 0, %s27
    %s28 = sphi 0, %s25
    %s29 = sphi 0, %s28
    %s45 = sphi 0, %s29
    %s49 = sphi 0, %s49
    %s51 = sphi 0, %s49
    %s52 = sphi 0, %s51
    %s66 = sphi 0, %s52
    %s70 = sphi 0, %s70
    %s72 = sphi 0, %s70
    %s73 = sphi 0, %s72
    %s87 = sphi 0, %s73
    %s91 = sphi 0, %s91
    %s93 = sphi 0, %s91
    %s94 = sphi 0, %s93
    %s108 = sphi 0, %s94
    %s112 = sphi 0, %s112
    %s114 = sphi 0, %s112
    %s115 = sphi 0, %s114
    %s129 = sphi 0, %s115
    %s133 = sphi 0, %s133
    %s135 = sphi 0, %s133
    %s136 = sphi 0, %s135
    %s150 = sphi 0, %s136
    %s154 = sphi 0, %s154
    %s156 = sphi 0, %s154
    %s157 = sphi 0, %s156
    %s171 = sphi 0, %s157
    %s177 = sphi 0, %s179
    %s180 = sphi 0, %s177
    %s181 = sphi 0, %s180
    %s197 = sphi 0, %s181
    %s203 = sphi 0, %s205
    %s206 = sphi 0, %s203
    %s207 = sphi 0, %s206
    %s223 = sphi 0, %s207
  $region4: #{basic_block_forward.2} parent=0 // loop_header_branch
    %18 = sbr.rel (%p16) target = $region8
  $region5: #{basic_block_forward.2} parent=0 // loop_body
    %s20 = ssub.s32 %s15, 1
    %s21 = ssub.s32 %s15, 2
    %s22 = sadd.s32 %s15, 1
    %s23 = ssub.s32 %s15, %s22
    %p24 = scmp.eq.s32.totalorder %s23, 0
    %s26 = sadd.s32 %s25, 1
    %s27 = scalar_select %p24, %s25, %s26
    %p30 = pneg %p24
    %p31 = scmp.eq.s32.totalorder %s15, 1
    %p32 = por %p30, %p31
    %p33 = scmp.ne.s32.totalorder %s25, %s28
    %p34 = scmp.eq.s32.totalorder %s15, 0
    %p35 = por %p33, %p34
    %p36 = scmp.ne.s32.totalorder %s25, %s28
    %p37 = scmp.eq.s32.totalorder %s20, 1
    %p38 = por %p36, %p37
    %p39 = scmp.ne.s32.totalorder %s28, %s29
    %p40 = scmp.eq.s32.totalorder %s20, 0
    %p41 = por %p39, %p40
    %p42 = scmp.ne.s32.totalorder %s28, %s29
    %p43 = scmp.eq.s32.totalorder %s21, 1
    %p44 = por %p42, %p43
    %p46 = scmp.ne.s32.totalorder %s29, %s45
    %p47 = scmp.eq.s32.totalorder %s21, 0
    %p48 = por %p46, %p47
    %s50 = sadd.s32 %s49, 1
    %p53 = scmp.eq.s32.totalorder %s15, 1
    %p54 = scmp.ne.s32.totalorder %s49, %s51
    %p55 = scmp.eq.s32.totalorder %s15, 0
    %p56 = por %p54, %p55
    %p57 = scmp.ne.s32.totalorder %s49, %s51
    %p58 = scmp.eq.s32.totalorder %s20, 1
    %p59 = por %p57, %p58
    %p60 = scmp.ne.s32.totalorder %s51, %s52
    %p61 = scmp.eq.s32.totalorder %s20, 0
    %p62 = por %p60, %p61
    %p63 = scmp.ne.s32.totalorder %s51, %s52
    %p64 = scmp.eq.s32.totalorder %s21, 1
    %p65 = por %p63, %p64
    %p67 = scmp.ne.s32.totalorder %s52, %s66
    %p68 = scmp.eq.s32.totalorder %s21, 0
    %p69 = por %p67, %p68
    %s71 = sadd.s32 %s70, 1
    %p74 = scmp.eq.s32.totalorder %s15, 1
    %p75 = scmp.ne.s32.totalorder %s70, %s72
    %p76 = scmp.eq.s32.totalorder %s15, 0
    %p77 = por %p75, %p76
    %p78 = scmp.ne.s32.totalorder %s70, %s72
    %p79 = scmp.eq.s32.totalorder %s20, 1
    %p80 = por %p78, %p79
    %p81 = scmp.ne.s32.totalorder %s72, %s73
    %p82 = scmp.eq.s32.totalorder %s20, 0
    %p83 = por %p81, %p82
    %p84 = scmp.ne.s32.totalorder %s72, %s73
    %p85 = scmp.eq.s32.totalorder %s21, 1
    %p86 = por %p84, %p85
    %p88 = scmp.ne.s32.totalorder %s73, %s87
    %p89 = scmp.eq.s32.totalorder %s21, 0
    %p90 = por %p88, %p89
    %s92 = sadd.s32 %s91, 1
    %p95 = scmp.eq.s32.totalorder %s15, 1
    %p96 = scmp.ne.s32.totalorder %s91, %s93
    %p97 = scmp.eq.s32.totalorder %s15, 0
    %p98 = por %p96, %p97
    %p99 = scmp.ne.s32.totalorder %s91, %s93
    %p100 = scmp.eq.s32.totalorder %s20, 1
    %p101 = por %p99, %p100
    %p102 = scmp.ne.s32.totalorder %s93, %s94
    %p103 = scmp.eq.s32.totalorder %s20, 0
    %p104 = por %p102, %p103
    %p105 = scmp.ne.s32.totalorder %s93, %s94
    %p106 = scmp.eq.s32.totalorder %s21, 1
    %p107 = por %p105, %p106
    %p109 = scmp.ne.s32.totalorder %s94, %s108
    %p110 = scmp.eq.s32.totalorder %s21, 0
    %p111 = por %p109, %p110
    %s113 = sadd.s32 %s112, 1
    %p116 = scmp.eq.s32.totalorder %s15, 1
    %p117 = scmp.ne.s32.totalorder %s112, %s114
    %p118 = scmp.eq.s32.totalorder %s15, 0
    %p119 = por %p117, %p118
    %p120 = scmp.ne.s32.totalorder %s112, %s114
    %p121 = scmp.eq.s32.totalorder %s20, 1
    %p122 = por %p120, %p121
    %p123 = scmp.ne.s32.totalorder %s114, %s115
    %p124 = scmp.eq.s32.totalorder %s20, 0
    %p125 = por %p123, %p124
    %p126 = scmp.ne.s32.totalorder %s114, %s115
    %p127 = scmp.eq.s32.totalorder %s21, 1
    %p128 = por %p126, %p127
    %p130 = scmp.ne.s32.totalorder %s115, %s129
    %p131 = scmp.eq.s32.totalorder %s21, 0
    %p132 = por %p130, %p131
    %s134 = sadd.s32 %s133, 1
    %p137 = scmp.eq.s32.totalorder %s15, 1
    %p138 = scmp.ne.s32.totalorder %s133, %s135
    %p139 = scmp.eq.s32.totalorder %s15, 0
    %p140 = por %p138, %p139
    %p141 = scmp.ne.s32.totalorder %s133, %s135
    %p142 = scmp.eq.s32.totalorder %s20, 1
    %p143 = por %p141, %p142
    %p144 = scmp.ne.s32.totalorder %s135, %s136
    %p145 = scmp.eq.s32.totalorder %s20, 0
    %p146 = por %p144, %p145
    %p147 = scmp.ne.s32.totalorder %s135, %s136
    %p148 = scmp.eq.s32.totalorder %s21, 1
    %p149 = por %p147, %p148
    %p151 = scmp.ne.s32.totalorder %s136, %s150
    %p152 = scmp.eq.s32.totalorder %s21, 0
    %p153 = por %p151, %p152
    %s155 = sadd.s32 %s154, 1
    %p158 = scmp.eq.s32.totalorder %s15, 1
    %p159 = scmp.ne.s32.totalorder %s154, %s156
    %p160 = scmp.eq.s32.totalorder %s15, 0
    %p161 = por %p159, %p160
    %p162 = scmp.ne.s32.totalorder %s154, %s156
    %p163 = scmp.eq.s32.totalorder %s20, 1
    %p164 = por %p162, %p163
    %p165 = scmp.ne.s32.totalorder %s156, %s157
    %p166 = scmp.eq.s32.totalorder %s20, 0
    %p167 = por %p165, %p166
    %p168 = scmp.ne.s32.totalorder %s156, %s157
    %p169 = scmp.eq.s32.totalorder %s21, 1
    %p170 = por %p168, %p169
    %p172 = scmp.ne.s32.totalorder %s157, %s171
    %p173 = scmp.eq.s32.totalorder %s21, 0
    %p174 = por %p172, %p173
    %s175 = ssub.s32 %s15, %s22
    %p176 = scmp.eq.s32.totalorder %s175, 0
    %s178 = sadd.s32 %s177, 1
    %s179 = scalar_select %p176, %s177, %s178
    %p182 = pneg %p176
    %p183 = scmp.eq.s32.totalorder %s15, 1
    %p184 = por %p182, %p183
    %p185 = scmp.ne.s32.totalorder %s177, %s180
    %p186 = scmp.eq.s32.totalorder %s15, 0
    %p187 = por %p185, %p186
    %p188 = scmp.ne.s32.totalorder %s177, %s180
    %p189 = scmp.eq.s32.totalorder %s20, 1
    %p190 = por %p188, %p189
    %p191 = scmp.ne.s32.totalorder %s180, %s181
    %p192 = scmp.eq.s32.totalorder %s20, 0
    %p193 = por %p191, %p192
    %p194 = scmp.ne.s32.totalorder %s180, %s181
    %p195 = scmp.eq.s32.totalorder %s21, 1
    %p196 = por %p194, %p195
    %p198 = scmp.ne.s32.totalorder %s181, %s197
    %p199 = scmp.eq.s32.totalorder %s21, 0
    %p200 = por %p198, %p199
    %s201 = ssub.s32 %s15, %s22
    %p202 = scmp.eq.s32.totalorder %s201, 0
    %s204 = sadd.s32 %s203, 1
    %s205 = scalar_select %p202, %s203, %s204
    %p208 = pneg %p202
    %p209 = scmp.eq.s32.totalorder %s15, 1
    %p210 = por %p208, %p209
    %p211 = scmp.ne.s32.totalorder %s203, %s206
    %p212 = scmp.eq.s32.totalorder %s15, 0
    %p213 = por %p211, %p212
    %p214 = scmp.ne.s32.totalorder %s203, %s206
    %p215 = scmp.eq.s32.totalorder %s20, 1
    %p216 = por %p214, %p215
    %p217 = scmp.ne.s32.totalorder %s206, %s207
    %p218 = scmp.eq.s32.totalorder %s20, 0
    %p219 = por %p217, %p218
    %p220 = scmp.ne.s32.totalorder %s206, %s207
    %p221 = scmp.eq.s32.totalorder %s21, 1
    %p222 = por %p220, %p221
    %p224 = scmp.ne.s32.totalorder %s207, %s223
    %p225 = scmp.eq.s32.totalorder %s21, 0
    %p226 = por %p224, %p225
    %p227 = scmp.le.s32.totalorder 1, %s15
    %p228 = scmp.lt.s32.totalorder %s15, 3
    %p229 = pnand %p227, %p228
    %p230 = pneg %p229
    // Predicated region
    $region9: #{basic_block_forward.2} parent=5 // pred_check
      _
    $region10: #{basic_block_forward.2} parent=5 // pred_check_branch
      %232 = sbr.rel (%p229) target = $region12
    $region11: #{basic_block_forward.2} parent=5 // pred_region
      %s233 = ssub.s32 %s15, 1
      // Predicated region
      $region13: #{basic_block_forward.2} parent=11 // pred_check
        %p234 = pneg %p62
      $region14: #{basic_block_forward.2} parent=11 // pred_check_branch
        %236 = sbr.rel (%p234) target = $region16
      $region15: #{basic_block_forward.2} parent=11 // pred_region
        _
      $region16: #{basic_block_forward.2} parent=11 // pred_fallthru
        _
      // Predicated region
      $region17: #{basic_block_forward.2} parent=11 // pred_check
        %p237 = pneg %p83
      $region18: #{basic_block_forward.2} parent=11 // pred_check_branch
        %239 = sbr.rel (%p237) target = $region20
      $region19: #{basic_block_forward.2} parent=11 // pred_region
        _
      $region20: #{basic_block_forward.2} parent=11 // pred_fallthru
        _
      // Predicated region
      $region21: #{basic_block_forward.2} parent=11 // pred_check
        %p240 = pneg %p104
      $region22: #{basic_block_forward.2} parent=11 // pred_check_branch
        %242 = sbr.rel (%p240) target = $region24
      $region23: #{basic_block_forward.2} parent=11 // pred_region
        _
      $region24: #{basic_block_forward.2} parent=11 // pred_fallthru
        _
      // Predicated region
      $region25: #{basic_block_forward.2} parent=11 // pred_check
        %p243 = pneg %p125
      $region26: #{basic_block_forward.2} parent=11 // pred_check_branch
        %245 = sbr.rel (%p243) target = $region28
      $region27: #{basic_block_forward.2} parent=11 // pred_region
        _
      $region28: #{basic_block_forward.2} parent=11 // pred_fallthru
        _
      // Predicated region
      $region29: #{basic_block_forward.2} parent=11 // pred_check
        %p246 = pneg %p146
      $region30: #{basic_block_forward.2} parent=11 // pred_check_branch
        %248 = sbr.rel (%p246) target = $region32
      $region31: #{basic_block_forward.2} parent=11 // pred_region
        _
      $region32: #{basic_block_forward.2} parent=11 // pred_fallthru
        _
      // Predicated region
      $region33: #{basic_block_forward.2} parent=11 // pred_check
        %p249 = pneg %p167
      $region34: #{basic_block_forward.2} parent=11 // pred_check_branch
        %251 = sbr.rel (%p249) target = $region36
      $region35: #{basic_block_forward.2} parent=11 // pred_region
        _
      $region36: #{basic_block_forward.2} parent=11 // pred_fallthru
        _
    $region12: #{basic_block_forward.2} parent=5 // pred_fallthru
      _
    %p252 = scmp.lt.s32.totalorder %s15, 2
    // Predicated region
    $region37: #{basic_block_forward.2} parent=5 // pred_check
      %p253 = pneg %p252
    $region38: #{basic_block_forward.2} parent=5 // pred_check_branch
      %255 = sbr.rel (%p253) target = $region40
    $region39: #{basic_block_forward.2} parent=5 // pred_region
      // Predicated region
      $region41: #{basic_block_forward.2} parent=39 // pred_check
        %p256 = pneg %p35
      $region42: #{basic_block_forward.2} parent=39 // pred_check_branch
        %258 = sbr.rel (%p256) target = $region44
      $region43: #{basic_block_forward.2} parent=39 // pred_region
        %p259 = scmp.lt.s32.totalorder %s15, 1
        %s260 = scalar_select %p259, %s15, 1
        %s261 = smul.addr %s260, 8
        %s262 = smul.addr %s261, 8
        %s263 = scalar_lea.vmem %s0, %s262
      $region44: #{basic_block_forward.2} parent=39 // pred_fallthru
        _
    $region40: #{basic_block_forward.2} parent=5 // pred_fallthru
      _
    %p264 = scmp.le.s32.totalorder 1, %s15
    %p265 = scmp.lt.s32.totalorder %s15, 3
    %p266 = pnand %p264, %p265
    %p267 = pneg %p266
    // Predicated region
    $region45: #{basic_block_forward.2} parent=5 // pred_check
      _
    $region46: #{basic_block_forward.2} parent=5 // pred_check_branch
      %269 = sbr.rel (%p266) target = $region48
    $region47: #{basic_block_forward.2} parent=5 // pred_region
      %s270 = ssub.s32 %s15, 1
      %p271 = scmp.lt.s32.totalorder %s20, 1
      %s272 = scalar_select %p271, %s20, 1
      %s273 = smul.addr %s272, 8
      %s274 = smul.addr %s273, 8
      %s275 = scalar_lea.vmem %s0, %s274
      %p276 = pneg %p41
      %p277 = pneg %p38
      %p278 = pneg %p62
      %p279 = pneg %p59
      %p280 = pneg %p83
      %p281 = pneg %p80
      %p282 = pneg %p104
      %p283 = pneg %p101
      %p284 = pneg %p125
      %p285 = pneg %p122
      %p286 = pneg %p146
      %p287 = pneg %p143
      %p288 = pneg %p167
      %p289 = pneg %p164
      %p290 = pneg %p193
      %p291 = pneg %p190
      %p292 = scmp.lt.s32.totalorder %s20, 1
      %s293 = scalar_select %p292, %s20, 1
      %s294 = smul.addr %s293, 8
      %s295 = smul.addr %s294, 4
      %s296 = scalar_lea.vmem %s7, %s295
      %p297 = pneg %p219
      %p298 = pneg %p216
      %p299 = scmp.lt.s32.totalorder %s20, 1
      %s300 = scalar_select %p299, %s20, 1
      %s301 = smul.addr %s300, 8
      %s302 = smul.addr %s301, 8
      %s303 = scalar_lea.vmem %s8, %s302
      %p304 = scmp.lt.s32.totalorder %s20, 1
      %s305 = scalar_select %p304, %s20, 1
      %s306 = smul.addr %s305, 8
      %s307 = smul.addr %s306, 8
      %s308 = scalar_lea.vmem %s0, %s307
      %p309 = scmp.lt.s32.totalorder %s20, 1
      %s310 = scalar_select %p309, %s20, 1
      %s311 = smul.addr %s310, 8
      %s312 = smul.addr %s311, 4
      %s313 = scalar_lea.vmem %s7, %s312
      %p314 = scmp.lt.s32.totalorder %s20, 1
      %s315 = scalar_select %p314, %s20, 1
      %s316 = smul.addr %s315, 8
      %s317 = smul.addr %s316, 8
      %s318 = scalar_lea.vmem %s8, %s317
      %319 = vst [vmem:[#allocation2] sm:$0xff] 0.0
      %320 = vst [vmem:[#allocation2 + $0x8] sm:$0x3] 0.0
      %321 = vst [vmem:[#allocation2 + $0x10] sm:$0xff] 0.0
      %322 = vst [vmem:[#allocation2 + $0x18] sm:$0x3] 0.0
      %323 = vst [vmem:[#allocation2 + $0x20] sm:$0xff] 0.0
      %324 = vst [vmem:[#allocation2 + $0x28] sm:$0x3] 0.0
      %325 = vst [vmem:[#allocation2 + $0x30] sm:$0xff] 0.0
      %326 = vst [vmem:[#allocation2 + $0x38] sm:$0x3] 0.0
      %327 = vst [vmem:[#allocation2 + $0x40] sm:$0xff] 0.0
      %328 = vst [vmem:[#allocation2 + $0x48] sm:$0x3] 0.0
      %329 = vst [vmem:[#allocation2 + $0x50] sm:$0xff] 0.0
      %330 = vst [vmem:[#allocation2 + $0x58] sm:$0x3] 0.0
      %331 = vst [vmem:[#allocation2 + $0x60] sm:$0xff] 0.0
      %332 = vst [vmem:[#allocation2 + $0x68] sm:$0x3] 0.0
      %333 = vst [vmem:[#allocation2 + $0x70] sm:$0xff] 0.0
      %334 = vst [vmem:[#allocation2 + $0x78] sm:$0x3] 0.0
      %335 = vst [vmem:[#allocation2 + $0x80] sm:$0xff] 0.0
      %336 = vst [vmem:[#allocation2 + $0x88] sm:$0x3] 0.0
      %337 = vst [vmem:[#allocation2 + $0x90] sm:$0xff] 0.0
      %338 = vst [vmem:[#allocation2 + $0x98] sm:$0x3] 0.0
      %v339 = vld [vmem:[%s308] sm:$0xff]
      %v340 = vld [vmem:[%s308 + $0x8] sm:$0xff]
      %v341 = vld [vmem:[%s308 + $0x10] sm:$0xff]
      %v342 = vld [vmem:[%s308 + $0x18] sm:$0xff]
      %v343 = vld [vmem:[%s308 + $0x20] sm:$0xff]
      %v344 = vld [vmem:[%s308 + $0x28] sm:$0xff]
      %v345 = vld [vmem:[%s308 + $0x30] sm:$0xff]
      %v346 = vld [vmem:[%s308 + $0x38] sm:$0xff]
      %v347 = vld [vmem:[%s1] sm:$0x1]
      %v349 = vperm.slane %v347, 0
      %v351 = vmul.f32 %v339, %v349
      %v352 = vmul.f32 %v340, %v349
      %v353 = vmul.f32 %v341, %v349
      %v354 = vmul.f32 %v342, %v349
      %v355 = vmul.f32 %v343, %v349
      %v356 = vmul.f32 %v344, %v349
      %v357 = vmul.f32 %v345, %v349
      %v358 = vmul.f32 %v346, %v349
      %v359 = vld [vmem:[%s2] sm:$0x1]
      %v361 = vperm.slane %v359, 0
      %v363 = vadd.f32 %v351, %v361
      %v364 = vadd.f32 %v352, %v361
      %v365 = vadd.f32 %v353, %v361
      %v366 = vadd.f32 %v354, %v361
      %v367 = vadd.f32 %v355, %v361
      %v368 = vadd.f32 %v356, %v361
      %v369 = vadd.f32 %v357, %v361
      %v370 = vadd.f32 %v358, %v361
      %v371 = vmax.f32 %v363, 0.0
      %v372 = vmax.f32 %v364, 0.0
      %v373 = vmax.f32 %v365, 0.0
      %v374 = vmax.f32 %v366, 0.0
      %v375 = vmax.f32 %v367, 0.0
      %v376 = vmax.f32 %v368, 0.0
      %v377 = vmax.f32 %v369, 0.0
      %v378 = vmax.f32 %v370, 0.0
      %s379 = scalar_lea.vmem [#allocation2], 16
      %380 = vst [vmem:[%s379 + $0x1] sm:$0xff] %v371
      %381 = vst [vmem:[%s379 + $0x11] sm:$0xff] %v372
      %382 = vst [vmem:[%s379 + $0x21] sm:$0xff] %v373
      %383 = vst [vmem:[%s379 + $0x31] sm:$0xff] %v374
      %384 = vst [vmem:[%s379 + $0x41] sm:$0xff] %v375
      %385 = vst [vmem:[%s379 + $0x51] sm:$0xff] %v376
      %386 = vst [vmem:[%s379 + $0x61] sm:$0xff] %v377
      %387 = vst [vmem:[%s379 + $0x71] sm:$0xff] %v378
      %v388 = vld [vmem:[#allocation2] sm:$0xff]
      %v389 = vld [vmem:[#allocation2 + $0x10] sm:$0xff]
      %v390 = vld [vmem:[#allocation2 + $0x20] sm:$0xff]
      %v391 = vld [vmem:[#allocation2 + $0x30] sm:$0xff]
      %v392 = vld [vmem:[#allocation2 + $0x40] sm:$0xff]
      %v393 = vld [vmem:[#allocation2 + $0x50] sm:$0xff]
      %v394 = vld [vmem:[#allocation2 + $0x60] sm:$0xff]
      %v395 = vld [vmem:[#allocation2 + $0x70] sm:$0xff]
      %v396 = vpack.c.bf16 %v389, %v388
      %v397 = vpack.c.bf16 %v391, %v390
      %v398 = vpack.c.bf16 %v393, %v392
      %v399 = vpack.c.bf16 %v395, %v394
      %v400 = vld [vmem:[%s3] sm:$0xf]
      %v401 = vld [vmem:[%s3 + $0x4] sm:$0xf]
      %v402 = vld [vmem:[%s3 + $0x8] sm:$0xf]
      %v403 = vld [vmem:[%s3 + $0xc] sm:$0xf]
      %v404 = vld [vmem:[%s3 + $0x10] sm:$0xf]
      %v405 = vld [vmem:[%s3 + $0x14] sm:$0xf]
      %v406 = vld [vmem:[%s3 + $0x18] sm:$0xf]
      %v407 = vld [vmem:[%s3 + $0x1c] sm:$0xf]
      %v408 = vld [vmem:[%s3 + $0x20] sm:$0xf]
      %v409 = vld [vmem:[%s3 + $0x24] sm:$0xf]
      %v410 = vld [vmem:[%s3 + $0x28] sm:$0xf]
      %v411 = vld [vmem:[%s3 + $0x2c] sm:$0xf]
      %v412 = vld [vmem:[%s3 + $0x30] sm:$0xf]
      %v413 = vld [vmem:[%s3 + $0x34] sm:$0xf]
      %v414 = vld [vmem:[%s3 + $0x38] sm:$0xf]
      %v415 = vld [vmem:[%s3 + $0x3c] sm:$0xf]
      %v416 = vld [vmem:[#allocation2 + $0x1] sm:$0xff]
      %v417 = vld [vmem:[#allocation2 + $0x11] sm:$0xff]
      %v418 = vld [vmem:[#allocation2 + $0x21] sm:$0xff]
      %v419 = vld [vmem:[#allocation2 + $0x31] sm:$0xff]
      %v420 = vld [vmem:[#allocation2 + $0x41] sm:$0xff]
      %v421 = vld [vmem:[#allocation2 + $0x51] sm:$0xff]
      %v422 = vld [vmem:[#allocation2 + $0x61] sm:$0xff]
      %v423 = vld [vmem:[#allocation2 + $0x71] sm:$0xff]
      %v424 = vpack.c.bf16 %v417, %v416
      %v425 = vpack.c.bf16 %v419, %v418
      %v426 = vpack.c.bf16 %v421, %v420
      %v427 = vpack.c.bf16 %v423, %v422
      %s428 = scalar_lea.vmem %s3, 64
      %v429 = vld [vmem:[%s428] sm:$0xf]
      %v430 = vld [vmem:[%s428 + $0x4] sm:$0xf]
      %v431 = vld [vmem:[%s428 + $0x8] sm:$0xf]
      %v432 = vld [vmem:[%s428 + $0xc] sm:$0xf]
      %v433 = vld [vmem:[%s428 + $0x10] sm:$0xf]
      %v434 = vld [vmem:[%s428 + $0x14] sm:$0xf]
      %v435 = vld [vmem:[%s428 + $0x18] sm:$0xf]
      %v436 = vld [vmem:[%s428 + $0x1c] sm:$0xf]
      %v437 = vld [vmem:[%s428 + $0x20] sm:$0xf]
      %v438 = vld [vmem:[%s428 + $0x24] sm:$0xf]
      %v439 = vld [vmem:[%s428 + $0x28] sm:$0xf]
      %v440 = vld [vmem:[%s428 + $0x2c] sm:$0xf]
      %v441 = vld [vmem:[%s428 + $0x30] sm:$0xf]
      %v442 = vld [vmem:[%s428 + $0x34] sm:$0xf]
      %v443 = vld [vmem:[%s428 + $0x38] sm:$0xf]
      %v444 = vld [vmem:[%s428 + $0x3c] sm:$0xf]
      %v461 = vunpack.c.l.b16 %v429
      %v462 = vunpack.c.l.b16 %v430
      %v463 = vunpack.c.l.b16 %v431
      %v464 = vunpack.c.l.b16 %v432
      %v465 = vunpack.c.l.b16 %v433
      %v466 = vunpack.c.l.b16 %v434
      %v467 = vunpack.c.l.b16 %v435
      %v468 = vunpack.c.l.b16 %v436
      %v469 = vunpack.c.l.b16 %v437
      %v470 = vunpack.c.l.b16 %v438
      %v471 = vunpack.c.l.b16 %v439
      %v472 = vunpack.c.l.b16 %v440
      %v473 = vunpack.c.l.b16 %v441
      %v474 = vunpack.c.l.b16 %v442
      %v475 = vunpack.c.l.b16 %v443
      %v476 = vunpack.c.l.b16 %v444
      %v477 = vpack.c.b16 %v462, %v461
      %v478 = vpack.c.b16 %v464, %v463
      %v479 = vpack.c.b16 %v466, %v465
      %v480 = vpack.c.b16 %v468, %v467
      %v481 = vpack.c.b16 %v470, %v469
      %v482 = vpack.c.b16 %v472, %v471
      %v483 = vpack.c.b16 %v474, %v473
      %v484 = vpack.c.b16 %v476, %v475
      %493 = vmatpush.bf16.msra.mxu0 %v484
      %494 = vmatpush.bf16.msra.mxu0 %v483
      %495 = vmatpush.bf16.msra.mxu0 %v482
      %496 = vmatpush.bf16.msra.mxu0 %v481
      %497 = vmatpush.bf16.msra.mxu0 %v480
      %498 = vmatpush.bf16.msra.mxu0 %v479
      %499 = vmatpush.bf16.msra.mxu0 %v478
      %500 = vmatpush.bf16.msra.mxu0 %v477
      %501 = vmatmul.bf16.gmra.mxu0 %v424
      %v502 = vpop.f32.mrf.mxu0
      %v503 = vadd.f32 0.0, %v502
      %v504 = vpop.f32.mrf.mxu0
      %v505 = vadd.f32 0.0, %v504
      %506 = vmatmul.bf16.gmra.mxu0 %v425
      %v507 = vpop.f32.mrf.mxu0
      %v508 = vadd.f32 0.0, %v507
      %v509 = vpop.f32.mrf.mxu0
      %v510 = vadd.f32 0.0, %v509
      %511 = vmatmul.bf16.gmra.mxu0 %v426
      %v512 = vpop.f32.mrf.mxu0
      %v513 = vadd.f32 0.0, %v512
      %v514 = vpop.f32.mrf.mxu0
      %v515 = vadd.f32 0.0, %v514
      %516 = vmatmul.bf16.gmra.mxu0 %v427
      %v517 = vpop.f32.mrf.mxu0
      %v518 = vadd.f32 0.0, %v517
      %v519 = vpop.f32.mrf.mxu0
      %v520 = vadd.f32 0.0, %v519
      %521 = vdwg.mxu0
      %v538 = vunpack.c.l.b16 %v400
      %v539 = vunpack.c.l.b16 %v401
      %v540 = vunpack.c.l.b16 %v402
      %v541 = vunpack.c.l.b16 %v403
      %v542 = vunpack.c.l.b16 %v404
      %v543 = vunpack.c.l.b16 %v405
      %v544 = vunpack.c.l.b16 %v406
      %v545 = vunpack.c.l.b16 %v407
      %v546 = vunpack.c.l.b16 %v408
      %v547 = vunpack.c.l.b16 %v409
      %v548 = vunpack.c.l.b16 %v410
      %v549 = vunpack.c.l.b16 %v411
      %v550 = vunpack.c.l.b16 %v412
      %v551 = vunpack.c.l.b16 %v413
      %v552 = vunpack.c.l.b16 %v414
      %v553 = vunpack.c.l.b16 %v415
      %v554 = vpack.c.b16 %v539, %v538
      %v555 = vpack.c.b16 %v541, %v540
      %v556 = vpack.c.b16 %v543, %v542
      %v557 = vpack.c.b16 %v545, %v544
      %v558 = vpack.c.b16 %v547, %v546
      %v559 = vpack.c.b16 %v549, %v548
      %v560 = vpack.c.b16 %v551, %v550
      %v561 = vpack.c.b16 %v553, %v552
      %570 = vmatpush.bf16.msra.mxu0 %v561
      %571 = vmatpush.bf16.msra.mxu0 %v560
      %572 = vmatpush.bf16.msra.mxu0 %v559
      %573 = vmatpush.bf16.msra.mxu0 %v558
      %574 = vmatpush.bf16.msra.mxu0 %v557
      %575 = vmatpush.bf16.msra.mxu0 %v556
      %576 = vmatpush.bf16.msra.mxu0 %v555
      %577 = vmatpush.bf16.msra.mxu0 %v554
      %578 = vmatmul.bf16.gmra.mxu0 %v396
      %v579 = vpop.f32.mrf.mxu0
      %v580 = vadd.f32 %v503, %v579
      %v581 = vpop.f32.mrf.mxu0
      %v582 = vadd.f32 %v505, %v581
      %583 = vmatmul.bf16.gmra.mxu0 %v397
      %v584 = vpop.f32.mrf.mxu0
      %v585 = vadd.f32 %v508, %v584
      %v586 = vpop.f32.mrf.mxu0
      %v587 = vadd.f32 %v510, %v586
      %588 = vmatmul.bf16.gmra.mxu0 %v398
      %v589 = vpop.f32.mrf.mxu0
      %v590 = vadd.f32 %v513, %v589
      %v591 = vpop.f32.mrf.mxu0
      %v592 = vadd.f32 %v515, %v591
      %593 = vmatmul.bf16.gmra.mxu0 %v399
      %v594 = vpop.f32.mrf.mxu0
      %v595 = vadd.f32 %v518, %v594
      %v596 = vpop.f32.mrf.mxu0
      %v597 = vadd.f32 %v520, %v596
      %598 = vdwg.mxu0
      %v599 = vld [vmem:[%s379] sm:$0xff]
      %v600 = vld [vmem:[%s379 + $0x10] sm:$0xff]
      %v601 = vld [vmem:[%s379 + $0x20] sm:$0xff]
      %v602 = vld [vmem:[%s379 + $0x30] sm:$0xff]
      %v603 = vld [vmem:[%s379 + $0x40] sm:$0xff]
      %v604 = vld [vmem:[%s379 + $0x50] sm:$0xff]
      %v605 = vld [vmem:[%s379 + $0x60] sm:$0xff]
      %v606 = vld [vmem:[%s379 + $0x70] sm:$0xff]
      %v607 = vpack.c.bf16 %v600, %v599
      %v608 = vpack.c.bf16 %v602, %v601
      %v609 = vpack.c.bf16 %v604, %v603
      %v610 = vpack.c.bf16 %v606, %v605
      %s611 = scalar_lea.vmem %s3, 128
      %v612 = vld [vmem:[%s611] sm:$0xf]
      %v613 = vld [vmem:[%s611 + $0x4] sm:$0xf]
      %v614 = vld [vmem:[%s611 + $0x8] sm:$0xf]
      %v615 = vld [vmem:[%s611 + $0xc] sm:$0xf]
      %v616 = vld [vmem:[%s611 + $0x10] sm:$0xf]
      %v617 = vld [vmem:[%s611 + $0x14] sm:$0xf]
      %v618 = vld [vmem:[%s611 + $0x18] sm:$0xf]
      %v619 = vld [vmem:[%s611 + $0x1c] sm:$0xf]
      %v620 = vld [vmem:[%s611 + $0x20] sm:$0xf]
      %v621 = vld [vmem:[%s611 + $0x24] sm:$0xf]
      %v622 = vld [vmem:[%s611 + $0x28] sm:$0xf]
      %v623 = vld [vmem:[%s611 + $0x2c] sm:$0xf]
      %v624 = vld [vmem:[%s611 + $0x30] sm:$0xf]
      %v625 = vld [vmem:[%s611 + $0x34] sm:$0xf]
      %v626 = vld [vmem:[%s611 + $0x38] sm:$0xf]
      %v627 = vld [vmem:[%s611 + $0x3c] sm:$0xf]
      %v644 = vunpack.c.l.b16 %v612
      %v645 = vunpack.c.l.b16 %v613
      %v646 = vunpack.c.l.b16 %v614
      %v647 = vunpack.c.l.b16 %v615
      %v648 = vunpack.c.l.b16 %v616
      %v649 = vunpack.c.l.b16 %v617
      %v650 = vunpack.c.l.b16 %v618
      %v651 = vunpack.c.l.b16 %v619
      %v652 = vunpack.c.l.b16 %v620
      %v653 = vunpack.c.l.b16 %v621
      %v654 = vunpack.c.l.b16 %v622
      %v655 = vunpack.c.l.b16 %v623
      %v656 = vunpack.c.l.b16 %v624
      %v657 = vunpack.c.l.b16 %v625
      %v658 = vunpack.c.l.b16 %v626
      %v659 = vunpack.c.l.b16 %v627
      %v660 = vpack.c.b16 %v645, %v644
      %v661 = vpack.c.b16 %v647, %v646
      %v662 = vpack.c.b16 %v649, %v648
      %v663 = vpack.c.b16 %v651, %v650
      %v664 = vpack.c.b16 %v653, %v652
      %v665 = vpack.c.b16 %v655, %v654
      %v666 = vpack.c.b16 %v657, %v656
      %v667 = vpack.c.b16 %v659, %v658
      %676 = vmatpush.bf16.msra.mxu0 %v667
      %677 = vmatpush.bf16.msra.mxu0 %v666
      %678 = vmatpush.bf16.msra.mxu0 %v665
      %679 = vmatpush.bf16.msra.mxu0 %v664
      %680 = vmatpush.bf16.msra.mxu0 %v663
      %681 = vmatpush.bf16.msra.mxu0 %v662
      %682 = vmatpush.bf16.msra.mxu0 %v661
      %683 = vmatpush.bf16.msra.mxu0 %v660
      %684 = vmatmul.bf16.gmra.mxu0 %v607
      %v685 = vpop.f32.mrf.mxu0
      %v686 = vadd.f32 0.0, %v685
      %v687 = vpop.f32.mrf.mxu0
      %v688 = vadd.f32 0.0, %v687
      %689 = vmatmul.bf16.gmra.mxu0 %v608
      %v690 = vpop.f32.mrf.mxu0
      %v691 = vadd.f32 0.0, %v690
      %v692 = vpop.f32.mrf.mxu0
      %v693 = vadd.f32 0.0, %v692
      %694 = vmatmul.bf16.gmra.mxu0 %v609
      %v695 = vpop.f32.mrf.mxu0
      %v696 = vadd.f32 0.0, %v695
      %v697 = vpop.f32.mrf.mxu0
      %v698 = vadd.f32 0.0, %v697
      %699 = vmatmul.bf16.gmra.mxu0 %v610
      %v700 = vpop.f32.mrf.mxu0
      %v701 = vadd.f32 0.0, %v700
      %v702 = vpop.f32.mrf.mxu0
      %v703 = vadd.f32 0.0, %v702
      %704 = vdwg.mxu0
      %v705 = vadd.f32 %v580, %v686
      %v706 = vadd.f32 %v582, %v688
      %v707 = vadd.f32 %v585, %v691
      %v708 = vadd.f32 %v587, %v693
      %v709 = vadd.f32 %v590, %v696
      %v710 = vadd.f32 %v592, %v698
      %v711 = vadd.f32 %v595, %v701
      %v712 = vadd.f32 %v597, %v703
      %v713 = vld [vmem:[%s379 + $0x1] sm:$0xff]
      %v714 = vld [vmem:[%s379 + $0x11] sm:$0xff]
      %v715 = vld [vmem:[%s379 + $0x21] sm:$0xff]
      %v716 = vld [vmem:[%s379 + $0x31] sm:$0xff]
      %v717 = vld [vmem:[%s379 + $0x41] sm:$0xff]
      %v718 = vld [vmem:[%s379 + $0x51] sm:$0xff]
      %v719 = vld [vmem:[%s379 + $0x61] sm:$0xff]
      %v720 = vld [vmem:[%s379 + $0x71] sm:$0xff]
      %v721 = vpack.c.bf16 %v714, %v713
      %v722 = vpack.c.bf16 %v716, %v715
      %v723 = vpack.c.bf16 %v718, %v717
      %v724 = vpack.c.bf16 %v720, %v719
      %s725 = scalar_lea.vmem %s3, 192
      %v726 = vld [vmem:[%s725] sm:$0xf]
      %v727 = vld [vmem:[%s725 + $0x4] sm:$0xf]
      %v728 = vld [vmem:[%s725 + $0x8] sm:$0xf]
      %v729 = vld [vmem:[%s725 + $0xc] sm:$0xf]
      %v730 = vld [vmem:[%s725 + $0x10] sm:$0xf]
      %v731 = vld [vmem:[%s725 + $0x14] sm:$0xf]
      %v732 = vld [vmem:[%s725 + $0x18] sm:$0xf]
      %v733 = vld [vmem:[%s725 + $0x1c] sm:$0xf]
      %v734 = vld [vmem:[%s725 + $0x20] sm:$0xf]
      %v735 = vld [vmem:[%s725 + $0x24] sm:$0xf]
      %v736 = vld [vmem:[%s725 + $0x28] sm:$0xf]
      %v737 = vld [vmem:[%s725 + $0x2c] sm:$0xf]
      %v738 = vld [vmem:[%s725 + $0x30] sm:$0xf]
      %v739 = vld [vmem:[%s725 + $0x34] sm:$0xf]
      %v740 = vld [vmem:[%s725 + $0x38] sm:$0xf]
      %v741 = vld [vmem:[%s725 + $0x3c] sm:$0xf]
      %v758 = vunpack.c.l.b16 %v726
      %v759 = vunpack.c.l.b16 %v727
      %v760 = vunpack.c.l.b16 %v728
      %v761 = vunpack.c.l.b16 %v729
      %v762 = vunpack.c.l.b16 %v730
      %v763 = vunpack.c.l.b16 %v731
      %v764 = vunpack.c.l.b16 %v732
      %v765 = vunpack.c.l.b16 %v733
      %v766 = vunpack.c.l.b16 %v734
      %v767 = vunpack.c.l.b16 %v735
      %v768 = vunpack.c.l.b16 %v736
      %v769 = vunpack.c.l.b16 %v737
      %v770 = vunpack.c.l.b16 %v738
      %v771 = vunpack.c.l.b16 %v739
      %v772 = vunpack.c.l.b16 %v740
      %v773 = vunpack.c.l.b16 %v741
      %v774 = vpack.c.b16 %v759, %v758
      %v775 = vpack.c.b16 %v761, %v760
      %v776 = vpack.c.b16 %v763, %v762
      %v777 = vpack.c.b16 %v765, %v764
      %v778 = vpack.c.b16 %v767, %v766
      %v779 = vpack.c.b16 %v769, %v768
      %v780 = vpack.c.b16 %v771, %v770
      %v781 = vpack.c.b16 %v773, %v772
      %790 = vmatpush.bf16.msra.mxu0 %v781
      %791 = vmatpush.bf16.msra.mxu0 %v780
      %792 = vmatpush.bf16.msra.mxu0 %v779
      %793 = vmatpush.bf16.msra.mxu0 %v778
      %794 = vmatpush.bf16.msra.mxu0 %v777
      %795 = vmatpush.bf16.msra.mxu0 %v776
      %796 = vmatpush.bf16.msra.mxu0 %v775
      %797 = vmatpush.bf16.msra.mxu0 %v774
      %798 = vmatmul.bf16.gmra.mxu0 %v721
      %v799 = vpop.f32.mrf.mxu0
      %v800 = vadd.f32 0.0, %v799
      %v801 = vpop.f32.mrf.mxu0
      %v802 = vadd.f32 0.0, %v801
      %803 = vmatmul.bf16.gmra.mxu0 %v722
      %v804 = vpop.f32.mrf.mxu0
      %v805 = vadd.f32 0.0, %v804
      %v806 = vpop.f32.mrf.mxu0
      %v807 = vadd.f32 0.0, %v806
      %808 = vmatmul.bf16.gmra.mxu0 %v723
      %v809 = vpop.f32.mrf.mxu0
      %v810 = vadd.f32 0.0, %v809
      %v811 = vpop.f32.mrf.mxu0
      %v812 = vadd.f32 0.0, %v811
      %813 = vmatmul.bf16.gmra.mxu0 %v724
      %v814 = vpop.f32.mrf.mxu0
      %v815 = vadd.f32 0.0, %v814
      %v816 = vpop.f32.mrf.mxu0
      %v817 = vadd.f32 0.0, %v816
      %818 = vdwg.mxu0
      %v819 = vadd.f32 %v705, %v800
      %v820 = vadd.f32 %v706, %v802
      %v821 = vadd.f32 %v707, %v805
      %v822 = vadd.f32 %v708, %v807
      %v823 = vadd.f32 %v709, %v810
      %v824 = vadd.f32 %v710, %v812
      %v825 = vadd.f32 %v711, %v815
      %v826 = vadd.f32 %v712, %v817
      %v827 = vld [vmem:[%s4] sm:$0x1]
      %v829 = vperm.slane %v827, 0
      %v831 = vmul.f32 %v819, %v829
      %v832 = vmul.f32 %v820, %v829
      %v833 = vmul.f32 %v821, %v829
      %v834 = vmul.f32 %v822, %v829
      %v835 = vmul.f32 %v823, %v829
      %v836 = vmul.f32 %v824, %v829
      %v837 = vmul.f32 %v825, %v829
      %v838 = vmul.f32 %v826, %v829
      %v839 = vld [vmem:[%s5] sm:$0x1]
      %v841 = vperm.slane %v839, 0
      %v843 = vadd.f32 %v831, %v841
      %v844 = vadd.f32 %v832, %v841
      %v845 = vadd.f32 %v833, %v841
      %v846 = vadd.f32 %v834, %v841
      %v847 = vadd.f32 %v835, %v841
      %v848 = vadd.f32 %v836, %v841
      %v849 = vadd.f32 %v837, %v841
      %v850 = vadd.f32 %v838, %v841
      %v851 = vmax.f32 %v843, 0.0
      %v852 = vmax.f32 %v844, 0.0
      %v853 = vmax.f32 %v845, 0.0
      %v854 = vmax.f32 %v846, 0.0
      %v855 = vmax.f32 %v847, 0.0
      %v856 = vmax.f32 %v848, 0.0
      %v857 = vmax.f32 %v849, 0.0
      %v858 = vmax.f32 %v850, 0.0
      %v859 = vpack.c.bf16 %v851, %v851
      %v860 = vpack.c.bf16 %v852, %v852
      %v861 = vpack.c.bf16 %v853, %v853
      %v862 = vpack.c.bf16 %v854, %v854
      %v863 = vpack.c.bf16 %v855, %v855
      %v864 = vpack.c.bf16 %v856, %v856
      %v865 = vpack.c.bf16 %v857, %v857
      %v866 = vpack.c.bf16 %v858, %v858
      %867 = vst [vmem:[%s313] sm:$0xf] %v859
      %868 = vst [vmem:[%s313 + $0x4] sm:$0xf] %v860
      %869 = vst [vmem:[%s313 + $0x8] sm:$0xf] %v861
      %870 = vst [vmem:[%s313 + $0xc] sm:$0xf] %v862
      %871 = vst [vmem:[%s313 + $0x10] sm:$0xf] %v863
      %872 = vst [vmem:[%s313 + $0x14] sm:$0xf] %v864
      %873 = vst [vmem:[%s313 + $0x18] sm:$0xf] %v865
      %874 = vst [vmem:[%s313 + $0x1c] sm:$0xf] %v866
      %v875 = vld [vmem:[%s379 + $0x1] sm:$0xff]
      %v876 = vld [vmem:[%s379 + $0x11] sm:$0xff]
      %v877 = vld [vmem:[%s379 + $0x21] sm:$0xff]
      %v878 = vld [vmem:[%s379 + $0x31] sm:$0xff]
      %v879 = vld [vmem:[%s379 + $0x41] sm:$0xff]
      %v880 = vld [vmem:[%s379 + $0x51] sm:$0xff]
      %v881 = vld [vmem:[%s379 + $0x61] sm:$0xff]
      %v882 = vld [vmem:[%s379 + $0x71] sm:$0xff]
      %v883 = vpack.c.bf16 %v876, %v875
      %v884 = vpack.c.bf16 %v878, %v877
      %v885 = vpack.c.bf16 %v880, %v879
      %v886 = vpack.c.bf16 %v882, %v881
      %v887 = vld [vmem:[%s6] sm:$0xf]
      %v888 = vld [vmem:[%s6 + $0x4] sm:$0xf]
      %v889 = vld [vmem:[%s6 + $0x8] sm:$0xf]
      %v890 = vld [vmem:[%s6 + $0xc] sm:$0xf]
      %v891 = vld [vmem:[%s6 + $0x10] sm:$0xf]
      %v892 = vld [vmem:[%s6 + $0x14] sm:$0xf]
      %v893 = vld [vmem:[%s6 + $0x18] sm:$0xf]
      %v894 = vld [vmem:[%s6 + $0x1c] sm:$0xf]
      %v895 = vld [vmem:[%s6 + $0x20] sm:$0xf]
      %v896 = vld [vmem:[%s6 + $0x24] sm:$0xf]
      %v897 = vld [vmem:[%s6 + $0x28] sm:$0xf]
      %v898 = vld [vmem:[%s6 + $0x2c] sm:$0xf]
      %v899 = vld [vmem:[%s6 + $0x30] sm:$0xf]
      %v900 = vld [vmem:[%s6 + $0x34] sm:$0xf]
      %v901 = vld [vmem:[%s6 + $0x38] sm:$0xf]
      %v902 = vld [vmem:[%s6 + $0x3c] sm:$0xf]
      %v919 = vunpack.c.l.b16 %v887
      %v920 = vunpack.c.l.b16 %v888
      %v921 = vunpack.c.l.b16 %v889
      %v922 = vunpack.c.l.b16 %v890
      %v923 = vunpack.c.l.b16 %v891
      %v924 = vunpack.c.l.b16 %v892
      %v925 = vunpack.c.l.b16 %v893
      %v926 = vunpack.c.l.b16 %v894
      %v927 = vunpack.c.l.b16 %v895
      %v928 = vunpack.c.l.b16 %v896
      %v929 = vunpack.c.l.b16 %v897
      %v930 = vunpack.c.l.b16 %v898
      %v931 = vunpack.c.l.b16 %v899
      %v932 = vunpack.c.l.b16 %v900
      %v933 = vunpack.c.l.b16 %v901
      %v934 = vunpack.c.l.b16 %v902
      %v935 = vpack.c.b16 %v920, %v919
      %v936 = vpack.c.b16 %v922, %v921
      %v937 = vpack.c.b16 %v924, %v923
      %v938 = vpack.c.b16 %v926, %v925
      %v939 = vpack.c.b16 %v928, %v927
      %v940 = vpack.c.b16 %v930, %v929
      %v941 = vpack.c.b16 %v932, %v931
      %v942 = vpack.c.b16 %v934, %v933
      %951 = vmatpush.bf16.msra.mxu0 %v942
      %952 = vmatpush.bf16.msra.mxu0 %v941
      %953 = vmatpush.bf16.msra.mxu0 %v940
      %954 = vmatpush.bf16.msra.mxu0 %v939
      %955 = vmatpush.bf16.msra.mxu0 %v938
      %956 = vmatpush.bf16.msra.mxu0 %v937
      %957 = vmatpush.bf16.msra.mxu0 %v936
      %958 = vmatpush.bf16.msra.mxu0 %v935
      %959 = vmatmul.bf16.gmra.mxu0 %v883
      %v960 = vpop.f32.mrf.mxu0
      %v961 = vadd.f32 0.0, %v960
      %v962 = vpop.f32.mrf.mxu0
      %v963 = vadd.f32 0.0, %v962
      %964 = vmatmul.bf16.gmra.mxu0 %v884
      %v965 = vpop.f32.mrf.mxu0
      %v966 = vadd.f32 0.0, %v965
      %v967 = vpop.f32.mrf.mxu0
      %v968 = vadd.f32 0.0, %v967
      %969 = vmatmul.bf16.gmra.mxu0 %v885
      %v970 = vpop.f32.mrf.mxu0
      %v971 = vadd.f32 0.0, %v970
      %v972 = vpop.f32.mrf.mxu0
      %v973 = vadd.f32 0.0, %v972
      %974 = vmatmul.bf16.gmra.mxu0 %v886
      %v975 = vpop.f32.mrf.mxu0
      %v976 = vadd.f32 0.0, %v975
      %v977 = vpop.f32.mrf.mxu0
      %v978 = vadd.f32 0.0, %v977
      %979 = vdwg.mxu0
      %980 = vst [vmem:[%s318] sm:$0xff] %v961
      %981 = vst [vmem:[%s318 + $0x8] sm:$0xff] %v963
      %982 = vst [vmem:[%s318 + $0x10] sm:$0xff] %v966
      %983 = vst [vmem:[%s318 + $0x18] sm:$0xff] %v968
      %984 = vst [vmem:[%s318 + $0x20] sm:$0xff] %v971
      %985 = vst [vmem:[%s318 + $0x28] sm:$0xff] %v973
      %986 = vst [vmem:[%s318 + $0x30] sm:$0xff] %v976
      %987 = vst [vmem:[%s318 + $0x38] sm:$0xff] %v978
      %p988 = scmp.lt.s32.totalorder %s20, 1
      %s989 = scalar_select %p988, %s20, 1
      %s990 = smul.addr %s989, 8
      %s991 = smul.addr %s990, 4
      %s992 = scalar_lea.vmem %s7, %s991
      %p993 = scmp.lt.s32.totalorder %s20, 1
      %s994 = scalar_select %p993, %s20, 1
      %s995 = smul.addr %s994, 8
      %s996 = smul.addr %s995, 8
      %s997 = scalar_lea.vmem %s8, %s996
      // Predicated region
      $region49: #{basic_block_forward.2} parent=47 // pred_check
        %p998 = pneg %p190
      $region50: #{basic_block_forward.2} parent=47 // pred_check_branch
        %1000 = sbr.rel (%p998) target = $region52
      $region51: #{basic_block_forward.2} parent=47 // pred_region
        _
      $region52: #{basic_block_forward.2} parent=47 // pred_fallthru
        _
      // Predicated region
      $region53: #{basic_block_forward.2} parent=47 // pred_check
        %p1001 = pneg %p216
      $region54: #{basic_block_forward.2} parent=47 // pred_check_branch
        %1003 = sbr.rel (%p1001) target = $region56
      $region55: #{basic_block_forward.2} parent=47 // pred_region
        _
      $region56: #{basic_block_forward.2} parent=47 // pred_fallthru
        _
    $region48: #{basic_block_forward.2} parent=5 // pred_fallthru
      _
    %p1004 = scmp.le.s32.totalorder 2, %s15
    // Predicated region
    $region57: #{basic_block_forward.2} parent=5 // pred_check
      %p1005 = pneg %p1004
    $region58: #{basic_block_forward.2} parent=5 // pred_check_branch
      %1007 = sbr.rel (%p1005) target = $region60
    $region59: #{basic_block_forward.2} parent=5 // pred_region
      %s1008 = ssub.s32 %s15, 2
      // Predicated region
      $region61: #{basic_block_forward.2} parent=59 // pred_check
        %p1009 = pneg %p196
      $region62: #{basic_block_forward.2} parent=59 // pred_check_branch
        %1011 = sbr.rel (%p1009) target = $region64
      $region63: #{basic_block_forward.2} parent=59 // pred_region
        %p1012 = scmp.lt.s32.totalorder %s21, 1
        %s1013 = scalar_select %p1012, %s21, 1
        %s1014 = smul.addr %s1013, 8
        %s1015 = smul.addr %s1014, 4
        %s1016 = scalar_lea.vmem %s7, %s1015
      $region64: #{basic_block_forward.2} parent=59 // pred_fallthru
        _
      // Predicated region
      $region65: #{basic_block_forward.2} parent=59 // pred_check
        %p1017 = pneg %p222
      $region66: #{basic_block_forward.2} parent=59 // pred_check_branch
        %1019 = sbr.rel (%p1017) target = $region68
      $region67: #{basic_block_forward.2} parent=59 // pred_region
        %p1020 = scmp.lt.s32.totalorder %s21, 1
        %s1021 = scalar_select %p1020, %s21, 1
        %s1022 = smul.addr %s1021, 8
        %s1023 = smul.addr %s1022, 8
        %s1024 = scalar_lea.vmem %s8, %s1023
      $region68: #{basic_block_forward.2} parent=59 // pred_fallthru
        _
    $region60: #{basic_block_forward.2} parent=5 // pred_fallthru
      _
  $region6: #{basic_block_forward.2} parent=0 // loop_footer
    %s19 = sadd.s32 1, %s15
  $region7: #{basic_block_forward.2} parent=0 // loop_footer_branch
    %14 = sbr.rel target = $region3
  $region8: #{basic_block_forward.2} parent=0 // loop_exit
    _

// kernel: basic_block_forward.3
$region0: #{basic_block_forward.3}
  #allocation0 [shape = 'u32[]', space=smem, size = 0x4, offset = 0x4, fixed_abs, tag = 'smem constant byte address 0x4 - core index']
  #allocation1 [shape = 'u32[72,128]{1,0:T(1,128)}', space=vmem, size = 0x9000, scoped, tag = 'internal scratch']
  #allocation2 [shape = 'f32[10,10,128]{2,1,0:T(8,128)}', space=vmem, size = 0x14000, scoped, tag = 'scratch operand']
  %s0 = inlined_call_operand.vmem [shape: bf16[2,8,8,128], index: 0, kind: input, shape index: {}]
  %s1 = inlined_call_operand.vmem [shape: bf16[9,128,128], index: 1, kind: input, shape index: {}]
  %s2 = inlined_call_operand.vmem [shape: f32[2,8,8,128], index: 2, kind: input, shape index: {}]
  %s3 = inlined_call_operand.vmem [shape: f32[2,8,8,128], index: 3, kind: output, shape index: {}]
  %s4 = sld [smem:[#allocation0]]
  $region45: #{basic_block_forward.3} parent=0
    _
  %s6 = ssub.s32 1, %s4
  %s7 = scalar_select 0, %s6, %s4
  loop: start=0, step=1, limit=4
  $region2: #{basic_block_forward.3} parent=0 // loop_pre_header
    _
  $region3: #{basic_block_forward.3} parent=0 // loop_header
    %s9 = sphi 0, %s13
    %p10 = scmp.ge.s32.totalorder %s9, 4
    %s19 = sphi 0, %s21
    %s22 = sphi 0, %s19
    %s23 = sphi 0, %s22
    %s39 = sphi 0, %s23
    %s43 = sphi 0, %s43
    %s45 = sphi 0, %s43
    %s46 = sphi 0, %s45
    %s60 = sphi 0, %s46
    %s66 = sphi 0, %s68
    %s69 = sphi 0, %s66
    %s70 = sphi 0, %s69
    %s86 = sphi 0, %s70
    %s92 = sphi 0, %s94
    %s95 = sphi 0, %s92
    %s96 = sphi 0, %s95
    %s112 = sphi 0, %s96
  $region4: #{basic_block_forward.3} parent=0 // loop_header_branch
    %12 = sbr.rel (%p10) target = $region8
  $region5: #{basic_block_forward.3} parent=0 // loop_body
    %s14 = ssub.s32 %s9, 1
    %s15 = ssub.s32 %s9, 2
    %s16 = sadd.s32 %s9, 1
    %s17 = ssub.s32 %s9, %s16
    %p18 = scmp.eq.s32.totalorder %s17, 0
    %s20 = sadd.s32 %s19, 1
    %s21 = scalar_select %p18, %s19, %s20
    %p24 = pneg %p18
    %p25 = scmp.eq.s32.totalorder %s9, 1
    %p26 = por %p24, %p25
    %p27 = scmp.ne.s32.totalorder %s19, %s22
    %p28 = scmp.eq.s32.totalorder %s9, 0
    %p29 = por %p27, %p28
    %p30 = scmp.ne.s32.totalorder %s19, %s22
    %p31 = scmp.eq.s32.totalorder %s14, 1
    %p32 = por %p30, %p31
    %p33 = scmp.ne.s32.totalorder %s22, %s23
    %p34 = scmp.eq.s32.totalorder %s14, 0
    %p35 = por %p33, %p34
    %p36 = scmp.ne.s32.totalorder %s22, %s23
    %p37 = scmp.eq.s32.totalorder %s15, 1
    %p38 = por %p36, %p37
    %p40 = scmp.ne.s32.totalorder %s23, %s39
    %p41 = scmp.eq.s32.totalorder %s15, 0
    %p42 = por %p40, %p41
    %s44 = sadd.s32 %s43, 1
    %p47 = scmp.eq.s32.totalorder %s9, 1
    %p48 = scmp.ne.s32.totalorder %s43, %s45
    %p49 = scmp.eq.s32.totalorder %s9, 0
    %p50 = por %p48, %p49
    %p51 = scmp.ne.s32.totalorder %s43, %s45
    %p52 = scmp.eq.s32.totalorder %s14, 1
    %p53 = por %p51, %p52
    %p54 = scmp.ne.s32.totalorder %s45, %s46
    %p55 = scmp.eq.s32.totalorder %s14, 0
    %p56 = por %p54, %p55
    %p57 = scmp.ne.s32.totalorder %s45, %s46
    %p58 = scmp.eq.s32.totalorder %s15, 1
    %p59 = por %p57, %p58
    %p61 = scmp.ne.s32.totalorder %s46, %s60
    %p62 = scmp.eq.s32.totalorder %s15, 0
    %p63 = por %p61, %p62
    %s64 = ssub.s32 %s9, %s16
    %p65 = scmp.eq.s32.totalorder %s64, 0
    %s67 = sadd.s32 %s66, 1
    %s68 = scalar_select %p65, %s66, %s67
    %p71 = pneg %p65
    %p72 = scmp.eq.s32.totalorder %s9, 1
    %p73 = por %p71, %p72
    %p74 = scmp.ne.s32.totalorder %s66, %s69
    %p75 = scmp.eq.s32.totalorder %s9, 0
    %p76 = por %p74, %p75
    %p77 = scmp.ne.s32.totalorder %s66, %s69
    %p78 = scmp.eq.s32.totalorder %s14, 1
    %p79 = por %p77, %p78
    %p80 = scmp.ne.s32.totalorder %s69, %s70
    %p81 = scmp.eq.s32.totalorder %s14, 0
    %p82 = por %p80, %p81
    %p83 = scmp.ne.s32.totalorder %s69, %s70
    %p84 = scmp.eq.s32.totalorder %s15, 1
    %p85 = por %p83, %p84
    %p87 = scmp.ne.s32.totalorder %s70, %s86
    %p88 = scmp.eq.s32.totalorder %s15, 0
    %p89 = por %p87, %p88
    %s90 = ssub.s32 %s9, %s16
    %p91 = scmp.eq.s32.totalorder %s90, 0
    %s93 = sadd.s32 %s92, 1
    %s94 = scalar_select %p91, %s92, %s93
    %p97 = pneg %p91
    %p98 = scmp.eq.s32.totalorder %s9, 1
    %p99 = por %p97, %p98
    %p100 = scmp.ne.s32.totalorder %s92, %s95
    %p101 = scmp.eq.s32.totalorder %s9, 0
    %p102 = por %p100, %p101
    %p103 = scmp.ne.s32.totalorder %s92, %s95
    %p104 = scmp.eq.s32.totalorder %s14, 1
    %p105 = por %p103, %p104
    %p106 = scmp.ne.s32.totalorder %s95, %s96
    %p107 = scmp.eq.s32.totalorder %s14, 0
    %p108 = por %p106, %p107
    %p109 = scmp.ne.s32.totalorder %s95, %s96
    %p110 = scmp.eq.s32.totalorder %s15, 1
    %p111 = por %p109, %p110
    %p113 = scmp.ne.s32.totalorder %s96, %s112
    %p114 = scmp.eq.s32.totalorder %s15, 0
    %p115 = por %p113, %p114
    %p116 = scmp.le.s32.totalorder 1, %s9
    %p117 = scmp.lt.s32.totalorder %s9, 3
    %p118 = pnand %p116, %p117
    %p119 = pneg %p118
    // Predicated region
    $region9: #{basic_block_forward.3} parent=5 // pred_check
      _
    $region10: #{basic_block_forward.3} parent=5 // pred_check_branch
      %121 = sbr.rel (%p118) target = $region12
    $region11: #{basic_block_forward.3} parent=5 // pred_region
      %s122 = ssub.s32 %s9, 1
      // Predicated region
      $region13: #{basic_block_forward.3} parent=11 // pred_check
        %p123 = pneg %p56
      $region14: #{basic_block_forward.3} parent=11 // pred_check_branch
        %125 = sbr.rel (%p123) target = $region16
      $region15: #{basic_block_forward.3} parent=11 // pred_region
        _
      $region16: #{basic_block_forward.3} parent=11 // pred_fallthru
        _
    $region12: #{basic_block_forward.3} parent=5 // pred_fallthru
      _
    %p126 = scmp.lt.s32.totalorder %s9, 2
    // Predicated region
    $region17: #{basic_block_forward.3} parent=5 // pred_check
      %p127 = pneg %p126
    $region18: #{basic_block_forward.3} parent=5 // pred_check_branch
      %129 = sbr.rel (%p127) target = $region20
    $region19: #{basic_block_forward.3} parent=5 // pred_region
      // Predicated region
      $region21: #{basic_block_forward.3} parent=19 // pred_check
        %p130 = pneg %p29
      $region22: #{basic_block_forward.3} parent=19 // pred_check_branch
        %132 = sbr.rel (%p130) target = $region24
      $region23: #{basic_block_forward.3} parent=19 // pred_region
        %p133 = scmp.lt.s32.totalorder %s9, 1
        %s134 = scalar_select %p133, %s9, 1
        %s135 = smul.addr %s134, 8
        %s136 = smul.addr %s135, 4
        %s137 = scalar_lea.vmem %s0, %s136
      $region24: #{basic_block_forward.3} parent=19 // pred_fallthru
        _
      // Predicated region
      $region25: #{basic_block_forward.3} parent=19 // pred_check
        %p138 = pneg %p76
      $region26: #{basic_block_forward.3} parent=19 // pred_check_branch
        %140 = sbr.rel (%p138) target = $region28
      $region27: #{basic_block_forward.3} parent=19 // pred_region
        %p141 = scmp.lt.s32.totalorder %s9, 1
        %s142 = scalar_select %p141, %s9, 1
        %s143 = smul.addr %s142, 8
        %s144 = smul.addr %s143, 8
        %s145 = scalar_lea.vmem %s2, %s144
      $region28: #{basic_block_forward.3} parent=19 // pred_fallthru
        _
    $region20: #{basic_block_forward.3} parent=5 // pred_fallthru
      _
    %p146 = scmp.le.s32.totalorder 1, %s9
    %p147 = scmp.lt.s32.totalorder %s9, 3
    %p148 = pnand %p146, %p147
    %p149 = pneg %p148
    // Predicated region
    $region29: #{basic_block_forward.3} parent=5 // pred_check
      _
    $region30: #{basic_block_forward.3} parent=5 // pred_check_branch
      %151 = sbr.rel (%p148) target = $region32
    $region31: #{basic_block_forward.3} parent=5 // pred_region
      %s152 = ssub.s32 %s9, 1
      %p153 = scmp.lt.s32.totalorder %s14, 1
      %s154 = scalar_select %p153, %s14, 1
      %s155 = smul.addr %s154, 8
      %s156 = smul.addr %s155, 4
      %s157 = scalar_lea.vmem %s0, %s156
      %p158 = pneg %p35
      %p159 = pneg %p32
      %p160 = pneg %p56
      %p161 = pneg %p53
      %p162 = scmp.lt.s32.totalorder %s14, 1
      %s163 = scalar_select %p162, %s14, 1
      %s164 = smul.addr %s163, 8
      %s165 = smul.addr %s164, 8
      %s166 = scalar_lea.vmem %s2, %s165
      %p167 = pneg %p82
      %p168 = pneg %p79
      %p169 = pneg %p108
      %p170 = pneg %p105
      %p171 = scmp.lt.s32.totalorder %s14, 1
      %s172 = scalar_select %p171, %s14, 1
      %s173 = smul.addr %s172, 8
      %s174 = smul.addr %s173, 8
      %s175 = scalar_lea.vmem %s3, %s174
      %p176 = scmp.lt.s32.totalorder %s14, 1
      %s177 = scalar_select %p176, %s14, 1
      %s178 = smul.addr %s177, 8
      %s179 = smul.addr %s178, 4
      %s180 = scalar_lea.vmem %s0, %s179
      %p181 = scmp.lt.s32.totalorder %s14, 1
      %s182 = scalar_select %p181, %s14, 1
      %s183 = smul.addr %s182, 8
      %s184 = smul.addr %s183, 8
      %s185 = scalar_lea.vmem %s2, %s184
      %p186 = scmp.lt.s32.totalorder %s14, 1
      %s187 = scalar_select %p186, %s14, 1
      %s188 = smul.addr %s187, 8
      %s189 = smul.addr %s188, 8
      %s190 = scalar_lea.vmem %s3, %s189
      %191 = vst [vmem:[#allocation2] sm:$0xff] 0.0
      %192 = vst [vmem:[#allocation2 + $0x8] sm:$0x3] 0.0
      %193 = vst [vmem:[#allocation2 + $0x10] sm:$0xff] 0.0
      %194 = vst [vmem:[#allocation2 + $0x18] sm:$0x3] 0.0
      %195 = vst [vmem:[#allocation2 + $0x20] sm:$0xff] 0.0
      %196 = vst [vmem:[#allocation2 + $0x28] sm:$0x3] 0.0
      %197 = vst [vmem:[#allocation2 + $0x30] sm:$0xff] 0.0
      %198 = vst [vmem:[#allocation2 + $0x38] sm:$0x3] 0.0
      %199 = vst [vmem:[#allocation2 + $0x40] sm:$0xff] 0.0
      %200 = vst [vmem:[#allocation2 + $0x48] sm:$0x3] 0.0
      %201 = vst [vmem:[#allocation2 + $0x50] sm:$0xff] 0.0
      %202 = vst [vmem:[#allocation2 + $0x58] sm:$0x3] 0.0
      %203 = vst [vmem:[#allocation2 + $0x60] sm:$0xff] 0.0
      %204 = vst [vmem:[#allocation2 + $0x68] sm:$0x3] 0.0
      %205 = vst [vmem:[#allocation2 + $0x70] sm:$0xff] 0.0
      %206 = vst [vmem:[#allocation2 + $0x78] sm:$0x3] 0.0
      %207 = vst [vmem:[#allocation2 + $0x80] sm:$0xff] 0.0
      %208 = vst [vmem:[#allocation2 + $0x88] sm:$0x3] 0.0
      %209 = vst [vmem:[#allocation2 + $0x90] sm:$0xff] 0.0
      %210 = vst [vmem:[#allocation2 + $0x98] sm:$0x3] 0.0
      %v211 = vld [vmem:[%s180] sm:$0xf]
      %v212 = vld [vmem:[%s180 + $0x4] sm:$0xf]
      %v213 = vld [vmem:[%s180 + $0x8] sm:$0xf]
      %v214 = vld [vmem:[%s180 + $0xc] sm:$0xf]
      %v215 = vld [vmem:[%s180 + $0x10] sm:$0xf]
      %v216 = vld [vmem:[%s180 + $0x14] sm:$0xf]
      %v217 = vld [vmem:[%s180 + $0x18] sm:$0xf]
      %v218 = vld [vmem:[%s180 + $0x1c] sm:$0xf]
      %v219 = vunpack.c.l.bf16 %v211
      %v220 = vunpack.c.l.bf16 %v212
      %v221 = vunpack.c.l.bf16 %v213
      %v222 = vunpack.c.l.bf16 %v214
      %v223 = vunpack.c.l.bf16 %v215
      %v224 = vunpack.c.l.bf16 %v216
      %v225 = vunpack.c.l.bf16 %v217
      %v226 = vunpack.c.l.bf16 %v218
      %s227 = scalar_lea.vmem [#allocation2], 16
      %228 = vst [vmem:[%s227 + $0x1] sm:$0xff] %v219
      %229 = vst [vmem:[%s227 + $0x11] sm:$0xff] %v220
      %230 = vst [vmem:[%s227 + $0x21] sm:$0xff] %v221
      %231 = vst [vmem:[%s227 + $0x31] sm:$0xff] %v222
      %232 = vst [vmem:[%s227 + $0x41] sm:$0xff] %v223
      %233 = vst [vmem:[%s227 + $0x51] sm:$0xff] %v224
      %234 = vst [vmem:[%s227 + $0x61] sm:$0xff] %v225
      %235 = vst [vmem:[%s227 + $0x71] sm:$0xff] %v226
      %v236 = vld [vmem:[#allocation2] sm:$0xff]
      %v237 = vld [vmem:[#allocation2 + $0x10] sm:$0xff]
      %v238 = vld [vmem:[#allocation2 + $0x20] sm:$0xff]
      %v239 = vld [vmem:[#allocation2 + $0x30] sm:$0xff]
      %v240 = vld [vmem:[#allocation2 + $0x40] sm:$0xff]
      %v241 = vld [vmem:[#allocation2 + $0x50] sm:$0xff]
      %v242 = vld [vmem:[#allocation2 + $0x60] sm:$0xff]
      %v243 = vld [vmem:[#allocation2 + $0x70] sm:$0xff]
      %v244 = vpack.c.bf16 %v237, %v236
      %v245 = vpack.c.bf16 %v239, %v238
      %v246 = vpack.c.bf16 %v241, %v240
      %v247 = vpack.c.bf16 %v243, %v242
      %v248 = vld [vmem:[%s1] sm:$0xf]
      %v249 = vld [vmem:[%s1 + $0x4] sm:$0xf]
      %v250 = vld [vmem:[%s1 + $0x8] sm:$0xf]
      %v251 = vld [vmem:[%s1 + $0xc] sm:$0xf]
      %v252 = vld [vmem:[%s1 + $0x10] sm:$0xf]
      %v253 = vld [vmem:[%s1 + $0x14] sm:$0xf]
      %v254 = vld [vmem:[%s1 + $0x18] sm:$0xf]
      %v255 = vld [vmem:[%s1 + $0x1c] sm:$0xf]
      %v256 = vld [vmem:[%s1 + $0x20] sm:$0xf]
      %v257 = vld [vmem:[%s1 + $0x24] sm:$0xf]
      %v258 = vld [vmem:[%s1 + $0x28] sm:$0xf]
      %v259 = vld [vmem:[%s1 + $0x2c] sm:$0xf]
      %v260 = vld [vmem:[%s1 + $0x30] sm:$0xf]
      %v261 = vld [vmem:[%s1 + $0x34] sm:$0xf]
      %v262 = vld [vmem:[%s1 + $0x38] sm:$0xf]
      %v263 = vld [vmem:[%s1 + $0x3c] sm:$0xf]
      %v264 = vld [vmem:[#allocation2 + $0x1] sm:$0xff]
      %v265 = vld [vmem:[#allocation2 + $0x11] sm:$0xff]
      %v266 = vld [vmem:[#allocation2 + $0x21] sm:$0xff]
      %v267 = vld [vmem:[#allocation2 + $0x31] sm:$0xff]
      %v268 = vld [vmem:[#allocation2 + $0x41] sm:$0xff]
      %v269 = vld [vmem:[#allocation2 + $0x51] sm:$0xff]
      %v270 = vld [vmem:[#allocation2 + $0x61] sm:$0xff]
      %v271 = vld [vmem:[#allocation2 + $0x71] sm:$0xff]
      %v272 = vpack.c.bf16 %v265, %v264
      %v273 = vpack.c.bf16 %v267, %v266
      %v274 = vpack.c.bf16 %v269, %v268
      %v275 = vpack.c.bf16 %v271, %v270
      %s276 = scalar_lea.vmem %s1, 64
      %v277 = vld [vmem:[%s276] sm:$0xf]
      %v278 = vld [vmem:[%s276 + $0x4] sm:$0xf]
      %v279 = vld [vmem:[%s276 + $0x8] sm:$0xf]
      %v280 = vld [vmem:[%s276 + $0xc] sm:$0xf]
      %v281 = vld [vmem:[%s276 + $0x10] sm:$0xf]
      %v282 = vld [vmem:[%s276 + $0x14] sm:$0xf]
      %v283 = vld [vmem:[%s276 + $0x18] sm:$0xf]
      %v284 = vld [vmem:[%s276 + $0x1c] sm:$0xf]
      %v285 = vld [vmem:[%s276 + $0x20] sm:$0xf]
      %v286 = vld [vmem:[%s276 + $0x24] sm:$0xf]
      %v287 = vld [vmem:[%s276 + $0x28] sm:$0xf]
      %v288 = vld [vmem:[%s276 + $0x2c] sm:$0xf]
      %v289 = vld [vmem:[%s276 + $0x30] sm:$0xf]
      %v290 = vld [vmem:[%s276 + $0x34] sm:$0xf]
      %v291 = vld [vmem:[%s276 + $0x38] sm:$0xf]
      %v292 = vld [vmem:[%s276 + $0x3c] sm:$0xf]
      %v309 = vunpack.c.l.b16 %v277
      %v310 = vunpack.c.l.b16 %v278
      %v311 = vunpack.c.l.b16 %v279
      %v312 = vunpack.c.l.b16 %v280
      %v313 = vunpack.c.l.b16 %v281
      %v314 = vunpack.c.l.b16 %v282
      %v315 = vunpack.c.l.b16 %v283
      %v316 = vunpack.c.l.b16 %v284
      %v317 = vunpack.c.l.b16 %v285
      %v318 = vunpack.c.l.b16 %v286
      %v319 = vunpack.c.l.b16 %v287
      %v320 = vunpack.c.l.b16 %v288
      %v321 = vunpack.c.l.b16 %v289
      %v322 = vunpack.c.l.b16 %v290
      %v323 = vunpack.c.l.b16 %v291
      %v324 = vunpack.c.l.b16 %v292
      %v325 = vpack.c.b16 %v310, %v309
      %v326 = vpack.c.b16 %v312, %v311
      %v327 = vpack.c.b16 %v314, %v313
      %v328 = vpack.c.b16 %v316, %v315
      %v329 = vpack.c.b16 %v318, %v317
      %v330 = vpack.c.b16 %v320, %v319
      %v331 = vpack.c.b16 %v322, %v321
      %v332 = vpack.c.b16 %v324, %v323
      %341 = vmatpush.bf16.msra.mxu0 %v332
      %342 = vmatpush.bf16.msra.mxu0 %v331
      %343 = vmatpush.bf16.msra.mxu0 %v330
      %344 = vmatpush.bf16.msra.mxu0 %v329
      %345 = vmatpush.bf16.msra.mxu0 %v328
      %346 = vmatpush.bf16.msra.mxu0 %v327
      %347 = vmatpush.bf16.msra.mxu0 %v326
      %348 = vmatpush.bf16.msra.mxu0 %v325
      %349 = vmatmul.bf16.gmra.mxu0 %v272
      %v350 = vpop.f32.mrf.mxu0
      %v351 = vadd.f32 0.0, %v350
      %v352 = vpop.f32.mrf.mxu0
      %v353 = vadd.f32 0.0, %v352
      %354 = vmatmul.bf16.gmra.mxu0 %v273
      %v355 = vpop.f32.mrf.mxu0
      %v356 = vadd.f32 0.0, %v355
      %v357 = vpop.f32.mrf.mxu0
      %v358 = vadd.f32 0.0, %v357
      %359 = vmatmul.bf16.gmra.mxu0 %v274
      %v360 = vpop.f32.mrf.mxu0
      %v361 = vadd.f32 0.0, %v360
      %v362 = vpop.f32.mrf.mxu0
      %v363 = vadd.f32 0.0, %v362
      %364 = vmatmul.bf16.gmra.mxu0 %v275
      %v365 = vpop.f32.mrf.mxu0
      %v366 = vadd.f32 0.0, %v365
      %v367 = vpop.f32.mrf.mxu0
      %v368 = vadd.f32 0.0, %v367
      %369 = vdwg.mxu0
      %v386 = vunpack.c.l.b16 %v248
      %v387 = vunpack.c.l.b16 %v249
      %v388 = vunpack.c.l.b16 %v250
      %v389 = vunpack.c.l.b16 %v251
      %v390 = vunpack.c.l.b16 %v252
      %v391 = vunpack.c.l.b16 %v253
      %v392 = vunpack.c.l.b16 %v254
      %v393 = vunpack.c.l.b16 %v255
      %v394 = vunpack.c.l.b16 %v256
      %v395 = vunpack.c.l.b16 %v257
      %v396 = vunpack.c.l.b16 %v258
      %v397 = vunpack.c.l.b16 %v259
      %v398 = vunpack.c.l.b16 %v260
      %v399 = vunpack.c.l.b16 %v261
      %v400 = vunpack.c.l.b16 %v262
      %v401 = vunpack.c.l.b16 %v263
      %v402 = vpack.c.b16 %v387, %v386
      %v403 = vpack.c.b16 %v389, %v388
      %v404 = vpack.c.b16 %v391, %v390
      %v405 = vpack.c.b16 %v393, %v392
      %v406 = vpack.c.b16 %v395, %v394
      %v407 = vpack.c.b16 %v397, %v396
      %v408 = vpack.c.b16 %v399, %v398
      %v409 = vpack.c.b16 %v401, %v400
      %418 = vmatpush.bf16.msra.mxu0 %v409
      %419 = vmatpush.bf16.msra.mxu0 %v408
      %420 = vmatpush.bf16.msra.mxu0 %v407
      %421 = vmatpush.bf16.msra.mxu0 %v406
      %422 = vmatpush.bf16.msra.mxu0 %v405
      %423 = vmatpush.bf16.msra.mxu0 %v404
      %424 = vmatpush.bf16.msra.mxu0 %v403
      %425 = vmatpush.bf16.msra.mxu0 %v402
      %426 = vmatmul.bf16.gmra.mxu0 %v244
      %v427 = vpop.f32.mrf.mxu0
      %v428 = vadd.f32 %v351, %v427
      %v429 = vpop.f32.mrf.mxu0
      %v430 = vadd.f32 %v353, %v429
      %431 = vmatmul.bf16.gmra.mxu0 %v245
      %v432 = vpop.f32.mrf.mxu0
      %v433 = vadd.f32 %v356, %v432
      %v434 = vpop.f32.mrf.mxu0
      %v435 = vadd.f32 %v358, %v434
      %436 = vmatmul.bf16.gmra.mxu0 %v246
      %v437 = vpop.f32.mrf.mxu0
      %v438 = vadd.f32 %v361, %v437
      %v439 = vpop.f32.mrf.mxu0
      %v440 = vadd.f32 %v363, %v439
      %441 = vmatmul.bf16.gmra.mxu0 %v247
      %v442 = vpop.f32.mrf.mxu0
      %v443 = vadd.f32 %v366, %v442
      %v444 = vpop.f32.mrf.mxu0
      %v445 = vadd.f32 %v368, %v444
      %446 = vdwg.mxu0
      %v447 = vld [vmem:[#allocation2 + $0x2] sm:$0xff]
      %v448 = vld [vmem:[#allocation2 + $0x12] sm:$0xff]
      %v449 = vld [vmem:[#allocation2 + $0x22] sm:$0xff]
      %v450 = vld [vmem:[#allocation2 + $0x32] sm:$0xff]
      %v451 = vld [vmem:[#allocation2 + $0x42] sm:$0xff]
      %v452 = vld [vmem:[#allocation2 + $0x52] sm:$0xff]
      %v453 = vld [vmem:[#allocation2 + $0x62] sm:$0xff]
      %v454 = vld [vmem:[#allocation2 + $0x72] sm:$0xff]
      %v455 = vpack.c.bf16 %v448, %v447
      %v456 = vpack.c.bf16 %v450, %v449
      %v457 = vpack.c.bf16 %v452, %v451
      %v458 = vpack.c.bf16 %v454, %v453
      %s459 = scalar_lea.vmem %s1, 128
      %v460 = vld [vmem:[%s459] sm:$0xf]
      %v461 = vld [vmem:[%s459 + $0x4] sm:$0xf]
      %v462 = vld [vmem:[%s459 + $0x8] sm:$0xf]
      %v463 = vld [vmem:[%s459 + $0xc] sm:$0xf]
      %v464 = vld [vmem:[%s459 + $0x10] sm:$0xf]
      %v465 = vld [vmem:[%s459 + $0x14] sm:$0xf]
      %v466 = vld [vmem:[%s459 + $0x18] sm:$0xf]
      %v467 = vld [vmem:[%s459 + $0x1c] sm:$0xf]
      %v468 = vld [vmem:[%s459 + $0x20] sm:$0xf]
      %v469 = vld [vmem:[%s459 + $0x24] sm:$0xf]
      %v470 = vld [vmem:[%s459 + $0x28] sm:$0xf]
      %v471 = vld [vmem:[%s459 + $0x2c] sm:$0xf]
      %v472 = vld [vmem:[%s459 + $0x30] sm:$0xf]
      %v473 = vld [vmem:[%s459 + $0x34] sm:$0xf]
      %v474 = vld [vmem:[%s459 + $0x38] sm:$0xf]
      %v475 = vld [vmem:[%s459 + $0x3c] sm:$0xf]
      %v492 = vunpack.c.l.b16 %v460
      %v493 = vunpack.c.l.b16 %v461
      %v494 = vunpack.c.l.b16 %v462
      %v495 = vunpack.c.l.b16 %v463
      %v496 = vunpack.c.l.b16 %v464
      %v497 = vunpack.c.l.b16 %v465
      %v498 = vunpack.c.l.b16 %v466
      %v499 = vunpack.c.l.b16 %v467
      %v500 = vunpack.c.l.b16 %v468
      %v501 = vunpack.c.l.b16 %v469
      %v502 = vunpack.c.l.b16 %v470
      %v503 = vunpack.c.l.b16 %v471
      %v504 = vunpack.c.l.b16 %v472
      %v505 = vunpack.c.l.b16 %v473
      %v506 = vunpack.c.l.b16 %v474
      %v507 = vunpack.c.l.b16 %v475
      %v508 = vpack.c.b16 %v493, %v492
      %v509 = vpack.c.b16 %v495, %v494
      %v510 = vpack.c.b16 %v497, %v496
      %v511 = vpack.c.b16 %v499, %v498
      %v512 = vpack.c.b16 %v501, %v500
      %v513 = vpack.c.b16 %v503, %v502
      %v514 = vpack.c.b16 %v505, %v504
      %v515 = vpack.c.b16 %v507, %v506
      %524 = vmatpush.bf16.msra.mxu0 %v515
      %525 = vmatpush.bf16.msra.mxu0 %v514
      %526 = vmatpush.bf16.msra.mxu0 %v513
      %527 = vmatpush.bf16.msra.mxu0 %v512
      %528 = vmatpush.bf16.msra.mxu0 %v511
      %529 = vmatpush.bf16.msra.mxu0 %v510
      %530 = vmatpush.bf16.msra.mxu0 %v509
      %531 = vmatpush.bf16.msra.mxu0 %v508
      %532 = vmatmul.bf16.gmra.mxu0 %v455
      %v533 = vpop.f32.mrf.mxu0
      %v534 = vadd.f32 0.0, %v533
      %v535 = vpop.f32.mrf.mxu0
      %v536 = vadd.f32 0.0, %v535
      %537 = vmatmul.bf16.gmra.mxu0 %v456
      %v538 = vpop.f32.mrf.mxu0
      %v539 = vadd.f32 0.0, %v538
      %v540 = vpop.f32.mrf.mxu0
      %v541 = vadd.f32 0.0, %v540
      %542 = vmatmul.bf16.gmra.mxu0 %v457
      %v543 = vpop.f32.mrf.mxu0
      %v544 = vadd.f32 0.0, %v543
      %v545 = vpop.f32.mrf.mxu0
      %v546 = vadd.f32 0.0, %v545
      %547 = vmatmul.bf16.gmra.mxu0 %v458
      %v548 = vpop.f32.mrf.mxu0
      %v549 = vadd.f32 0.0, %v548
      %v550 = vpop.f32.mrf.mxu0
      %v551 = vadd.f32 0.0, %v550
      %552 = vdwg.mxu0
      %v553 = vadd.f32 %v428, %v534
      %v554 = vadd.f32 %v430, %v536
      %v555 = vadd.f32 %v433, %v539
      %v556 = vadd.f32 %v435, %v541
      %v557 = vadd.f32 %v438, %v544
      %v558 = vadd.f32 %v440, %v546
      %v559 = vadd.f32 %v443, %v549
      %v560 = vadd.f32 %v445, %v551
      %v561 = vld [vmem:[%s227] sm:$0xff]
      %v562 = vld [vmem:[%s227 + $0x10] sm:$0xff]
      %v563 = vld [vmem:[%s227 + $0x20] sm:$0xff]
      %v564 = vld [vmem:[%s227 + $0x30] sm:$0xff]
      %v565 = vld [vmem:[%s227 + $0x40] sm:$0xff]
      %v566 = vld [vmem:[%s227 + $0x50] sm:$0xff]
      %v567 = vld [vmem:[%s227 + $0x60] sm:$0xff]
      %v568 = vld [vmem:[%s227 + $0x70] sm:$0xff]
      %v569 = vpack.c.bf16 %v562, %v561
      %v570 = vpack.c.bf16 %v564, %v563
      %v571 = vpack.c.bf16 %v566, %v565
      %v572 = vpack.c.bf16 %v568, %v567
      %s573 = scalar_lea.vmem %s1, 192
      %v574 = vld [vmem:[%s573] sm:$0xf]
      %v575 = vld [vmem:[%s573 + $0x4] sm:$0xf]
      %v576 = vld [vmem:[%s573 + $0x8] sm:$0xf]
      %v577 = vld [vmem:[%s573 + $0xc] sm:$0xf]
      %v578 = vld [vmem:[%s573 + $0x10] sm:$0xf]
      %v579 = vld [vmem:[%s573 + $0x14] sm:$0xf]
      %v580 = vld [vmem:[%s573 + $0x18] sm:$0xf]
      %v581 = vld [vmem:[%s573 + $0x1c] sm:$0xf]
      %v582 = vld [vmem:[%s573 + $0x20] sm:$0xf]
      %v583 = vld [vmem:[%s573 + $0x24] sm:$0xf]
      %v584 = vld [vmem:[%s573 + $0x28] sm:$0xf]
      %v585 = vld [vmem:[%s573 + $0x2c] sm:$0xf]
      %v586 = vld [vmem:[%s573 + $0x30] sm:$0xf]
      %v587 = vld [vmem:[%s573 + $0x34] sm:$0xf]
      %v588 = vld [vmem:[%s573 + $0x38] sm:$0xf]
      %v589 = vld [vmem:[%s573 + $0x3c] sm:$0xf]
      %v606 = vunpack.c.l.b16 %v574
      %v607 = vunpack.c.l.b16 %v575
      %v608 = vunpack.c.l.b16 %v576
      %v609 = vunpack.c.l.b16 %v577
      %v610 = vunpack.c.l.b16 %v578
      %v611 = vunpack.c.l.b16 %v579
      %v612 = vunpack.c.l.b16 %v580
      %v613 = vunpack.c.l.b16 %v581
      %v614 = vunpack.c.l.b16 %v582
      %v615 = vunpack.c.l.b16 %v583
      %v616 = vunpack.c.l.b16 %v584
      %v617 = vunpack.c.l.b16 %v585
      %v618 = vunpack.c.l.b16 %v586
      %v619 = vunpack.c.l.b16 %v587
      %v620 = vunpack.c.l.b16 %v588
      %v621 = vunpack.c.l.b16 %v589
      %v622 = vpack.c.b16 %v607, %v606
      %v623 = vpack.c.b16 %v609, %v608
      %v624 = vpack.c.b16 %v611, %v610
      %v625 = vpack.c.b16 %v613, %v612
      %v626 = vpack.c.b16 %v615, %v614
      %v627 = vpack.c.b16 %v617, %v616
      %v628 = vpack.c.b16 %v619, %v618
      %v629 = vpack.c.b16 %v621, %v620
      %638 = vmatpush.bf16.msra.mxu0 %v629
      %639 = vmatpush.bf16.msra.mxu0 %v628
      %640 = vmatpush.bf16.msra.mxu0 %v627
      %641 = vmatpush.bf16.msra.mxu0 %v626
      %642 = vmatpush.bf16.msra.mxu0 %v625
      %643 = vmatpush.bf16.msra.mxu0 %v624
      %644 = vmatpush.bf16.msra.mxu0 %v623
      %645 = vmatpush.bf16.msra.mxu0 %v622
      %646 = vmatmul.bf16.gmra.mxu0 %v569
      %v647 = vpop.f32.mrf.mxu0
      %v648 = vadd.f32 0.0, %v647
      %v649 = vpop.f32.mrf.mxu0
      %v650 = vadd.f32 0.0, %v649
      %651 = vmatmul.bf16.gmra.mxu0 %v570
      %v652 = vpop.f32.mrf.mxu0
      %v653 = vadd.f32 0.0, %v652
      %v654 = vpop.f32.mrf.mxu0
      %v655 = vadd.f32 0.0, %v654
      %656 = vmatmul.bf16.gmra.mxu0 %v571
      %v657 = vpop.f32.mrf.mxu0
      %v658 = vadd.f32 0.0, %v657
      %v659 = vpop.f32.mrf.mxu0
      %v660 = vadd.f32 0.0, %v659
      %661 = vmatmul.bf16.gmra.mxu0 %v572
      %v662 = vpop.f32.mrf.mxu0
      %v663 = vadd.f32 0.0, %v662
      %v664 = vpop.f32.mrf.mxu0
      %v665 = vadd.f32 0.0, %v664
      %666 = vdwg.mxu0
      %v667 = vadd.f32 %v553, %v648
      %v668 = vadd.f32 %v554, %v650
      %v669 = vadd.f32 %v555, %v653
      %v670 = vadd.f32 %v556, %v655
      %v671 = vadd.f32 %v557, %v658
      %v672 = vadd.f32 %v558, %v660
      %v673 = vadd.f32 %v559, %v663
      %v674 = vadd.f32 %v560, %v665
      %v675 = vld [vmem:[%s227 + $0x1] sm:$0xff]
      %v676 = vld [vmem:[%s227 + $0x11] sm:$0xff]
      %v677 = vld [vmem:[%s227 + $0x21] sm:$0xff]
      %v678 = vld [vmem:[%s227 + $0x31] sm:$0xff]
      %v679 = vld [vmem:[%s227 + $0x41] sm:$0xff]
      %v680 = vld [vmem:[%s227 + $0x51] sm:$0xff]
      %v681 = vld [vmem:[%s227 + $0x61] sm:$0xff]
      %v682 = vld [vmem:[%s227 + $0x71] sm:$0xff]
      %v683 = vpack.c.bf16 %v676, %v675
      %v684 = vpack.c.bf16 %v678, %v677
      %v685 = vpack.c.bf16 %v680, %v679
      %v686 = vpack.c.bf16 %v682, %v681
      %s687 = scalar_lea.vmem %s1, 256
      %v688 = vld [vmem:[%s687] sm:$0xf]
      %v689 = vld [vmem:[%s687 + $0x4] sm:$0xf]
      %v690 = vld [vmem:[%s687 + $0x8] sm:$0xf]
      %v691 = vld [vmem:[%s687 + $0xc] sm:$0xf]
      %v692 = vld [vmem:[%s687 + $0x10] sm:$0xf]
      %v693 = vld [vmem:[%s687 + $0x14] sm:$0xf]
      %v694 = vld [vmem:[%s687 + $0x18] sm:$0xf]
      %v695 = vld [vmem:[%s687 + $0x1c] sm:$0xf]
      %v696 = vld [vmem:[%s687 + $0x20] sm:$0xf]
      %v697 = vld [vmem:[%s687 + $0x24] sm:$0xf]
      %v698 = vld [vmem:[%s687 + $0x28] sm:$0xf]
      %v699 = vld [vmem:[%s687 + $0x2c] sm:$0xf]
      %v700 = vld [vmem:[%s687 + $0x30] sm:$0xf]
      %v701 = vld [vmem:[%s687 + $0x34] sm:$0xf]
      %v702 = vld [vmem:[%s687 + $0x38] sm:$0xf]
      %v703 = vld [vmem:[%s687 + $0x3c] sm:$0xf]
      %v720 = vunpack.c.l.b16 %v688
      %v721 = vunpack.c.l.b16 %v689
      %v722 = vunpack.c.l.b16 %v690
      %v723 = vunpack.c.l.b16 %v691
      %v724 = vunpack.c.l.b16 %v692
      %v725 = vunpack.c.l.b16 %v693
      %v726 = vunpack.c.l.b16 %v694
      %v727 = vunpack.c.l.b16 %v695
      %v728 = vunpack.c.l.b16 %v696
      %v729 = vunpack.c.l.b16 %v697
      %v730 = vunpack.c.l.b16 %v698
      %v731 = vunpack.c.l.b16 %v699
      %v732 = vunpack.c.l.b16 %v700
      %v733 = vunpack.c.l.b16 %v701
      %v734 = vunpack.c.l.b16 %v702
      %v735 = vunpack.c.l.b16 %v703
      %v736 = vpack.c.b16 %v721, %v720
      %v737 = vpack.c.b16 %v723, %v722
      %v738 = vpack.c.b16 %v725, %v724
      %v739 = vpack.c.b16 %v727, %v726
      %v740 = vpack.c.b16 %v729, %v728
      %v741 = vpack.c.b16 %v731, %v730
      %v742 = vpack.c.b16 %v733, %v732
      %v743 = vpack.c.b16 %v735, %v734
      %752 = vmatpush.bf16.msra.mxu0 %v743
      %753 = vmatpush.bf16.msra.mxu0 %v742
      %754 = vmatpush.bf16.msra.mxu0 %v741
      %755 = vmatpush.bf16.msra.mxu0 %v740
      %756 = vmatpush.bf16.msra.mxu0 %v739
      %757 = vmatpush.bf16.msra.mxu0 %v738
      %758 = vmatpush.bf16.msra.mxu0 %v737
      %759 = vmatpush.bf16.msra.mxu0 %v736
      %760 = vmatmul.bf16.gmra.mxu0 %v683
      %v761 = vpop.f32.mrf.mxu0
      %v762 = vadd.f32 0.0, %v761
      %v763 = vpop.f32.mrf.mxu0
      %v764 = vadd.f32 0.0, %v763
      %765 = vmatmul.bf16.gmra.mxu0 %v684
      %v766 = vpop.f32.mrf.mxu0
      %v767 = vadd.f32 0.0, %v766
      %v768 = vpop.f32.mrf.mxu0
      %v769 = vadd.f32 0.0, %v768
      %770 = vmatmul.bf16.gmra.mxu0 %v685
      %v771 = vpop.f32.mrf.mxu0
      %v772 = vadd.f32 0.0, %v771
      %v773 = vpop.f32.mrf.mxu0
      %v774 = vadd.f32 0.0, %v773
      %775 = vmatmul.bf16.gmra.mxu0 %v686
      %v776 = vpop.f32.mrf.mxu0
      %v777 = vadd.f32 0.0, %v776
      %v778 = vpop.f32.mrf.mxu0
      %v779 = vadd.f32 0.0, %v778
      %780 = vdwg.mxu0
      %v781 = vadd.f32 %v667, %v762
      %v782 = vadd.f32 %v668, %v764
      %v783 = vadd.f32 %v669, %v767
      %v784 = vadd.f32 %v670, %v769
      %v785 = vadd.f32 %v671, %v772
      %v786 = vadd.f32 %v672, %v774
      %v787 = vadd.f32 %v673, %v777
      %v788 = vadd.f32 %v674, %v779
      %v789 = vld [vmem:[%s227 + $0x2] sm:$0xff]
      %v790 = vld [vmem:[%s227 + $0x12] sm:$0xff]
      %v791 = vld [vmem:[%s227 + $0x22] sm:$0xff]
      %v792 = vld [vmem:[%s227 + $0x32] sm:$0xff]
      %v793 = vld [vmem:[%s227 + $0x42] sm:$0xff]
      %v794 = vld [vmem:[%s227 + $0x52] sm:$0xff]
      %v795 = vld [vmem:[%s227 + $0x62] sm:$0xff]
      %v796 = vld [vmem:[%s227 + $0x72] sm:$0xff]
      %v797 = vpack.c.bf16 %v790, %v789
      %v798 = vpack.c.bf16 %v792, %v791
      %v799 = vpack.c.bf16 %v794, %v793
      %v800 = vpack.c.bf16 %v796, %v795
      %s801 = scalar_lea.vmem %s1, 320
      %v802 = vld [vmem:[%s801] sm:$0xf]
      %v803 = vld [vmem:[%s801 + $0x4] sm:$0xf]
      %v804 = vld [vmem:[%s801 + $0x8] sm:$0xf]
      %v805 = vld [vmem:[%s801 + $0xc] sm:$0xf]
      %v806 = vld [vmem:[%s801 + $0x10] sm:$0xf]
      %v807 = vld [vmem:[%s801 + $0x14] sm:$0xf]
      %v808 = vld [vmem:[%s801 + $0x18] sm:$0xf]
      %v809 = vld [vmem:[%s801 + $0x1c] sm:$0xf]
      %v810 = vld [vmem:[%s801 + $0x20] sm:$0xf]
      %v811 = vld [vmem:[%s801 + $0x24] sm:$0xf]
      %v812 = vld [vmem:[%s801 + $0x28] sm:$0xf]
      %v813 = vld [vmem:[%s801 + $0x2c] sm:$0xf]
      %v814 = vld [vmem:[%s801 + $0x30] sm:$0xf]
      %v815 = vld [vmem:[%s801 + $0x34] sm:$0xf]
      %v816 = vld [vmem:[%s801 + $0x38] sm:$0xf]
      %v817 = vld [vmem:[%s801 + $0x3c] sm:$0xf]
      %v834 = vunpack.c.l.b16 %v802
      %v835 = vunpack.c.l.b16 %v803
      %v836 = vunpack.c.l.b16 %v804
      %v837 = vunpack.c.l.b16 %v805
      %v838 = vunpack.c.l.b16 %v806
      %v839 = vunpack.c.l.b16 %v807
      %v840 = vunpack.c.l.b16 %v808
      %v841 = vunpack.c.l.b16 %v809
      %v842 = vunpack.c.l.b16 %v810
      %v843 = vunpack.c.l.b16 %v811
      %v844 = vunpack.c.l.b16 %v812
      %v845 = vunpack.c.l.b16 %v813
      %v846 = vunpack.c.l.b16 %v814
      %v847 = vunpack.c.l.b16 %v815
      %v848 = vunpack.c.l.b16 %v816
      %v849 = vunpack.c.l.b16 %v817
      %v850 = vpack.c.b16 %v835, %v834
      %v851 = vpack.c.b16 %v837, %v836
      %v852 = vpack.c.b16 %v839, %v838
      %v853 = vpack.c.b16 %v841, %v840
      %v854 = vpack.c.b16 %v843, %v842
      %v855 = vpack.c.b16 %v845, %v844
      %v856 = vpack.c.b16 %v847, %v846
      %v857 = vpack.c.b16 %v849, %v848
      %866 = vmatpush.bf16.msra.mxu0 %v857
      %867 = vmatpush.bf16.msra.mxu0 %v856
      %868 = vmatpush.bf16.msra.mxu0 %v855
      %869 = vmatpush.bf16.msra.mxu0 %v854
      %870 = vmatpush.bf16.msra.mxu0 %v853
      %871 = vmatpush.bf16.msra.mxu0 %v852
      %872 = vmatpush.bf16.msra.mxu0 %v851
      %873 = vmatpush.bf16.msra.mxu0 %v850
      %874 = vmatmul.bf16.gmra.mxu0 %v797
      %v875 = vpop.f32.mrf.mxu0
      %v876 = vadd.f32 0.0, %v875
      %v877 = vpop.f32.mrf.mxu0
      %v878 = vadd.f32 0.0, %v877
      %879 = vmatmul.bf16.gmra.mxu0 %v798
      %v880 = vpop.f32.mrf.mxu0
      %v881 = vadd.f32 0.0, %v880
      %v882 = vpop.f32.mrf.mxu0
      %v883 = vadd.f32 0.0, %v882
      %884 = vmatmul.bf16.gmra.mxu0 %v799
      %v885 = vpop.f32.mrf.mxu0
      %v886 = vadd.f32 0.0, %v885
      %v887 = vpop.f32.mrf.mxu0
      %v888 = vadd.f32 0.0, %v887
      %889 = vmatmul.bf16.gmra.mxu0 %v800
      %v890 = vpop.f32.mrf.mxu0
      %v891 = vadd.f32 0.0, %v890
      %v892 = vpop.f32.mrf.mxu0
      %v893 = vadd.f32 0.0, %v892
      %894 = vdwg.mxu0
      %v895 = vadd.f32 %v781, %v876
      %v896 = vadd.f32 %v782, %v878
      %v897 = vadd.f32 %v783, %v881
      %v898 = vadd.f32 %v784, %v883
      %v899 = vadd.f32 %v785, %v886
      %v900 = vadd.f32 %v786, %v888
      %v901 = vadd.f32 %v787, %v891
      %v902 = vadd.f32 %v788, %v893
      %s903 = scalar_lea.vmem [#allocation2], 32
      %v904 = vld [vmem:[%s903] sm:$0xff]
      %v905 = vld [vmem:[%s903 + $0x10] sm:$0xff]
      %v906 = vld [vmem:[%s903 + $0x20] sm:$0xff]
      %v907 = vld [vmem:[%s903 + $0x30] sm:$0xff]
      %v908 = vld [vmem:[%s903 + $0x40] sm:$0xff]
      %v909 = vld [vmem:[%s903 + $0x50] sm:$0xff]
      %v910 = vld [vmem:[%s903 + $0x60] sm:$0xff]
      %v911 = vld [vmem:[%s903 + $0x70] sm:$0xff]
      %v912 = vpack.c.bf16 %v905, %v904
      %v913 = vpack.c.bf16 %v907, %v906
      %v914 = vpack.c.bf16 %v909, %v908
      %v915 = vpack.c.bf16 %v911, %v910
      %s916 = scalar_lea.vmem %s1, 384
      %v917 = vld [vmem:[%s916] sm:$0xf]
      %v918 = vld [vmem:[%s916 + $0x4] sm:$0xf]
      %v919 = vld [vmem:[%s916 + $0x8] sm:$0xf]
      %v920 = vld [vmem:[%s916 + $0xc] sm:$0xf]
      %v921 = vld [vmem:[%s916 + $0x10] sm:$0xf]
      %v922 = vld [vmem:[%s916 + $0x14] sm:$0xf]
      %v923 = vld [vmem:[%s916 + $0x18] sm:$0xf]
      %v924 = vld [vmem:[%s916 + $0x1c] sm:$0xf]
      %v925 = vld [vmem:[%s916 + $0x20] sm:$0xf]
      %v926 = vld [vmem:[%s916 + $0x24] sm:$0xf]
      %v927 = vld [vmem:[%s916 + $0x28] sm:$0xf]
      %v928 = vld [vmem:[%s916 + $0x2c] sm:$0xf]
      %v929 = vld [vmem:[%s916 + $0x30] sm:$0xf]
      %v930 = vld [vmem:[%s916 + $0x34] sm:$0xf]
      %v931 = vld [vmem:[%s916 + $0x38] sm:$0xf]
      %v932 = vld [vmem:[%s916 + $0x3c] sm:$0xf]
      %v949 = vunpack.c.l.b16 %v917
      %v950 = vunpack.c.l.b16 %v918
      %v951 = vunpack.c.l.b16 %v919
      %v952 = vunpack.c.l.b16 %v920
      %v953 = vunpack.c.l.b16 %v921
      %v954 = vunpack.c.l.b16 %v922
      %v955 = vunpack.c.l.b16 %v923
      %v956 = vunpack.c.l.b16 %v924
      %v957 = vunpack.c.l.b16 %v925
      %v958 = vunpack.c.l.b16 %v926
      %v959 = vunpack.c.l.b16 %v927
      %v960 = vunpack.c.l.b16 %v928
      %v961 = vunpack.c.l.b16 %v929
      %v962 = vunpack.c.l.b16 %v930
      %v963 = vunpack.c.l.b16 %v931
      %v964 = vunpack.c.l.b16 %v932
      %v965 = vpack.c.b16 %v950, %v949
      %v966 = vpack.c.b16 %v952, %v951
      %v967 = vpack.c.b16 %v954, %v953
      %v968 = vpack.c.b16 %v956, %v955
      %v969 = vpack.c.b16 %v958, %v957
      %v970 = vpack.c.b16 %v960, %v959
      %v971 = vpack.c.b16 %v962, %v961
      %v972 = vpack.c.b16 %v964, %v963
      %981 = vmatpush.bf16.msra.mxu0 %v972
      %982 = vmatpush.bf16.msra.mxu0 %v971
      %983 = vmatpush.bf16.msra.mxu0 %v970
      %984 = vmatpush.bf16.msra.mxu0 %v969
      %985 = vmatpush.bf16.msra.mxu0 %v968
      %986 = vmatpush.bf16.msra.mxu0 %v967
      %987 = vmatpush.bf16.msra.mxu0 %v966
      %988 = vmatpush.bf16.msra.mxu0 %v965
      %989 = vmatmul.bf16.gmra.mxu0 %v912
      %v990 = vpop.f32.mrf.mxu0
      %v991 = vadd.f32 0.0, %v990
      %v992 = vpop.f32.mrf.mxu0
      %v993 = vadd.f32 0.0, %v992
      %994 = vmatmul.bf16.gmra.mxu0 %v913
      %v995 = vpop.f32.mrf.mxu0
      %v996 = vadd.f32 0.0, %v995
      %v997 = vpop.f32.mrf.mxu0
      %v998 = vadd.f32 0.0, %v997
      %999 = vmatmul.bf16.gmra.mxu0 %v914
      %v1000 = vpop.f32.mrf.mxu0
      %v1001 = vadd.f32 0.0, %v1000
      %v1002 = vpop.f32.mrf.mxu0
      %v1003 = vadd.f32 0.0, %v1002
      %1004 = vmatmul.bf16.gmra.mxu0 %v915
      %v1005 = vpop.f32.mrf.mxu0
      %v1006 = vadd.f32 0.0, %v1005
      %v1007 = vpop.f32.mrf.mxu0
      %v1008 = vadd.f32 0.0, %v1007
      %1009 = vdwg.mxu0
      %v1010 = vadd.f32 %v895, %v991
      %v1011 = vadd.f32 %v896, %v993
      %v1012 = vadd.f32 %v897, %v996
      %v1013 = vadd.f32 %v898, %v998
      %v1014 = vadd.f32 %v899, %v1001
      %v1015 = vadd.f32 %v900, %v1003
      %v1016 = vadd.f32 %v901, %v1006
      %v1017 = vadd.f32 %v902, %v1008
      %v1018 = vld [vmem:[%s903 + $0x1] sm:$0xff]
      %v1019 = vld [vmem:[%s903 + $0x11] sm:$0xff]
      %v1020 = vld [vmem:[%s903 + $0x21] sm:$0xff]
      %v1021 = vld [vmem:[%s903 + $0x31] sm:$0xff]
      %v1022 = vld [vmem:[%s903 + $0x41] sm:$0xff]
      %v1023 = vld [vmem:[%s903 + $0x51] sm:$0xff]
      %v1024 = vld [vmem:[%s903 + $0x61] sm:$0xff]
      %v1025 = vld [vmem:[%s903 + $0x71] sm:$0xff]
      %v1026 = vpack.c.bf16 %v1019, %v1018
      %v1027 = vpack.c.bf16 %v1021, %v1020
      %v1028 = vpack.c.bf16 %v1023, %v1022
      %v1029 = vpack.c.bf16 %v1025, %v1024
      %s1030 = scalar_lea.vmem %s1, 448
      %v1031 = vld [vmem:[%s1030] sm:$0xf]
      %v1032 = vld [vmem:[%s1030 + $0x4] sm:$0xf]
      %v1033 = vld [vmem:[%s1030 + $0x8] sm:$0xf]
      %v1034 = vld [vmem:[%s1030 + $0xc] sm:$0xf]
      %v1035 = vld [vmem:[%s1030 + $0x10] sm:$0xf]
      %v1036 = vld [vmem:[%s1030 + $0x14] sm:$0xf]
      %v1037 = vld [vmem:[%s1030 + $0x18] sm:$0xf]
      %v1038 = vld [vmem:[%s1030 + $0x1c] sm:$0xf]
      %v1039 = vld [vmem:[%s1030 + $0x20] sm:$0xf]
      %v1040 = vld [vmem:[%s1030 + $0x24] sm:$0xf]
      %v1041 = vld [vmem:[%s1030 + $0x28] sm:$0xf]
      %v1042 = vld [vmem:[%s1030 + $0x2c] sm:$0xf]
      %v1043 = vld [vmem:[%s1030 + $0x30] sm:$0xf]
      %v1044 = vld [vmem:[%s1030 + $0x34] sm:$0xf]
      %v1045 = vld [vmem:[%s1030 + $0x38] sm:$0xf]
      %v1046 = vld [vmem:[%s1030 + $0x3c] sm:$0xf]
      %v1063 = vunpack.c.l.b16 %v1031
      %v1064 = vunpack.c.l.b16 %v1032
      %v1065 = vunpack.c.l.b16 %v1033
      %v1066 = vunpack.c.l.b16 %v1034
      %v1067 = vunpack.c.l.b16 %v1035
      %v1068 = vunpack.c.l.b16 %v1036
      %v1069 = vunpack.c.l.b16 %v1037
      %v1070 = vunpack.c.l.b16 %v1038
      %v1071 = vunpack.c.l.b16 %v1039
      %v1072 = vunpack.c.l.b16 %v1040
      %v1073 = vunpack.c.l.b16 %v1041
      %v1074 = vunpack.c.l.b16 %v1042
      %v1075 = vunpack.c.l.b16 %v1043
      %v1076 = vunpack.c.l.b16 %v1044
      %v1077 = vunpack.c.l.b16 %v1045
      %v1078 = vunpack.c.l.b16 %v1046
      %v1079 = vpack.c.b16 %v1064, %v1063
      %v1080 = vpack.c.b16 %v1066, %v1065
      %v1081 = vpack.c.b16 %v1068, %v1067
      %v1082 = vpack.c.b16 %v1070, %v1069
      %v1083 = vpack.c.b16 %v1072, %v1071
      %v1084 = vpack.c.b16 %v1074, %v1073
      %v1085 = vpack.c.b16 %v1076, %v1075
      %v1086 = vpack.c.b16 %v1078, %v1077
      %1095 = vmatpush.bf16.msra.mxu0 %v1086
      %1096 = vmatpush.bf16.msra.mxu0 %v1085
      %1097 = vmatpush.bf16.msra.mxu0 %v1084
      %1098 = vmatpush.bf16.msra.mxu0 %v1083
      %1099 = vmatpush.bf16.msra.mxu0 %v1082
      %1100 = vmatpush.bf16.msra.mxu0 %v1081
      %1101 = vmatpush.bf16.msra.mxu0 %v1080
      %1102 = vmatpush.bf16.msra.mxu0 %v1079
      %1103 = vmatmul.bf16.gmra.mxu0 %v1026
      %v1104 = vpop.f32.mrf.mxu0
      %v1105 = vadd.f32 0.0, %v1104
      %v1106 = vpop.f32.mrf.mxu0
      %v1107 = vadd.f32 0.0, %v1106
      %1108 = vmatmul.bf16.gmra.mxu0 %v1027
      %v1109 = vpop.f32.mrf.mxu0
      %v1110 = vadd.f32 0.0, %v1109
      %v1111 = vpop.f32.mrf.mxu0
      %v1112 = vadd.f32 0.0, %v1111
      %1113 = vmatmul.bf16.gmra.mxu0 %v1028
      %v1114 = vpop.f32.mrf.mxu0
      %v1115 = vadd.f32 0.0, %v1114
      %v1116 = vpop.f32.mrf.mxu0
      %v1117 = vadd.f32 0.0, %v1116
      %1118 = vmatmul.bf16.gmra.mxu0 %v1029
      %v1119 = vpop.f32.mrf.mxu0
      %v1120 = vadd.f32 0.0, %v1119
      %v1121 = vpop.f32.mrf.mxu0
      %v1122 = vadd.f32 0.0, %v1121
      %1123 = vdwg.mxu0
      %v1124 = vadd.f32 %v1010, %v1105
      %v1125 = vadd.f32 %v1011, %v1107
      %v1126 = vadd.f32 %v1012, %v1110
      %v1127 = vadd.f32 %v1013, %v1112
      %v1128 = vadd.f32 %v1014, %v1115
      %v1129 = vadd.f32 %v1015, %v1117
      %v1130 = vadd.f32 %v1016, %v1120
      %v1131 = vadd.f32 %v1017, %v1122
      %v1132 = vld [vmem:[%s903 + $0x2] sm:$0xff]
      %v1133 = vld [vmem:[%s903 + $0x12] sm:$0xff]
      %v1134 = vld [vmem:[%s903 + $0x22] sm:$0xff]
      %v1135 = vld [vmem:[%s903 + $0x32] sm:$0xff]
      %v1136 = vld [vmem:[%s903 + $0x42] sm:$0xff]
      %v1137 = vld [vmem:[%s903 + $0x52] sm:$0xff]
      %v1138 = vld [vmem:[%s903 + $0x62] sm:$0xff]
      %v1139 = vld [vmem:[%s903 + $0x72] sm:$0xff]
      %v1140 = vpack.c.bf16 %v1133, %v1132
      %v1141 = vpack.c.bf16 %v1135, %v1134
      %v1142 = vpack.c.bf16 %v1137, %v1136
      %v1143 = vpack.c.bf16 %v1139, %v1138
      %s1144 = scalar_lea.vmem %s1, 512
      %v1145 = vld [vmem:[%s1144] sm:$0xf]
      %v1146 = vld [vmem:[%s1144 + $0x4] sm:$0xf]
      %v1147 = vld [vmem:[%s1144 + $0x8] sm:$0xf]
      %v1148 = vld [vmem:[%s1144 + $0xc] sm:$0xf]
      %v1149 = vld [vmem:[%s1144 + $0x10] sm:$0xf]
      %v1150 = vld [vmem:[%s1144 + $0x14] sm:$0xf]
      %v1151 = vld [vmem:[%s1144 + $0x18] sm:$0xf]
      %v1152 = vld [vmem:[%s1144 + $0x1c] sm:$0xf]
      %v1153 = vld [vmem:[%s1144 + $0x20] sm:$0xf]
      %v1154 = vld [vmem:[%s1144 + $0x24] sm:$0xf]
      %v1155 = vld [vmem:[%s1144 + $0x28] sm:$0xf]
      %v1156 = vld [vmem:[%s1144 + $0x2c] sm:$0xf]
      %v1157 = vld [vmem:[%s1144 + $0x30] sm:$0xf]
      %v1158 = vld [vmem:[%s1144 + $0x34] sm:$0xf]
      %v1159 = vld [vmem:[%s1144 + $0x38] sm:$0xf]
      %v1160 = vld [vmem:[%s1144 + $0x3c] sm:$0xf]
      %v1177 = vunpack.c.l.b16 %v1145
      %v1178 = vunpack.c.l.b16 %v1146
      %v1179 = vunpack.c.l.b16 %v1147
      %v1180 = vunpack.c.l.b16 %v1148
      %v1181 = vunpack.c.l.b16 %v1149
      %v1182 = vunpack.c.l.b16 %v1150
      %v1183 = vunpack.c.l.b16 %v1151
      %v1184 = vunpack.c.l.b16 %v1152
      %v1185 = vunpack.c.l.b16 %v1153
      %v1186 = vunpack.c.l.b16 %v1154
      %v1187 = vunpack.c.l.b16 %v1155
      %v1188 = vunpack.c.l.b16 %v1156
      %v1189 = vunpack.c.l.b16 %v1157
      %v1190 = vunpack.c.l.b16 %v1158
      %v1191 = vunpack.c.l.b16 %v1159
      %v1192 = vunpack.c.l.b16 %v1160
      %v1193 = vpack.c.b16 %v1178, %v1177
      %v1194 = vpack.c.b16 %v1180, %v1179
      %v1195 = vpack.c.b16 %v1182, %v1181
      %v1196 = vpack.c.b16 %v1184, %v1183
      %v1197 = vpack.c.b16 %v1186, %v1185
      %v1198 = vpack.c.b16 %v1188, %v1187
      %v1199 = vpack.c.b16 %v1190, %v1189
      %v1200 = vpack.c.b16 %v1192, %v1191
      %1209 = vmatpush.bf16.msra.mxu0 %v1200
      %1210 = vmatpush.bf16.msra.mxu0 %v1199
      %1211 = vmatpush.bf16.msra.mxu0 %v1198
      %1212 = vmatpush.bf16.msra.mxu0 %v1197
      %1213 = vmatpush.bf16.msra.mxu0 %v1196
      %1214 = vmatpush.bf16.msra.mxu0 %v1195
      %1215 = vmatpush.bf16.msra.mxu0 %v1194
      %1216 = vmatpush.bf16.msra.mxu0 %v1193
      %1217 = vmatmul.bf16.gmra.mxu0 %v1140
      %v1218 = vpop.f32.mrf.mxu0
      %v1219 = vadd.f32 0.0, %v1218
      %v1220 = vpop.f32.mrf.mxu0
      %v1221 = vadd.f32 0.0, %v1220
      %1222 = vmatmul.bf16.gmra.mxu0 %v1141
      %v1223 = vpop.f32.mrf.mxu0
      %v1224 = vadd.f32 0.0, %v1223
      %v1225 = vpop.f32.mrf.mxu0
      %v1226 = vadd.f32 0.0, %v1225
      %1227 = vmatmul.bf16.gmra.mxu0 %v1142
      %v1228 = vpop.f32.mrf.mxu0
      %v1229 = vadd.f32 0.0, %v1228
      %v1230 = vpop.f32.mrf.mxu0
      %v1231 = vadd.f32 0.0, %v1230
      %1232 = vmatmul.bf16.gmra.mxu0 %v1143
      %v1233 = vpop.f32.mrf.mxu0
      %v1234 = vadd.f32 0.0, %v1233
      %v1235 = vpop.f32.mrf.mxu0
      %v1236 = vadd.f32 0.0, %v1235
      %1237 = vdwg.mxu0
      %v1238 = vadd.f32 %v1124, %v1219
      %v1239 = vadd.f32 %v1125, %v1221
      %v1240 = vadd.f32 %v1126, %v1224
      %v1241 = vadd.f32 %v1127, %v1226
      %v1242 = vadd.f32 %v1128, %v1229
      %v1243 = vadd.f32 %v1129, %v1231
      %v1244 = vadd.f32 %v1130, %v1234
      %v1245 = vadd.f32 %v1131, %v1236
      %v1246 = vld [vmem:[%s185] sm:$0xff]
      %v1247 = vld [vmem:[%s185 + $0x8] sm:$0xff]
      %v1248 = vld [vmem:[%s185 + $0x10] sm:$0xff]
      %v1249 = vld [vmem:[%s185 + $0x18] sm:$0xff]
      %v1250 = vld [vmem:[%s185 + $0x20] sm:$0xff]
      %v1251 = vld [vmem:[%s185 + $0x28] sm:$0xff]
      %v1252 = vld [vmem:[%s185 + $0x30] sm:$0xff]
      %v1253 = vld [vmem:[%s185 + $0x38] sm:$0xff]
      %v1254 = vadd.f32 %v1238, %v1246
      %v1255 = vadd.f32 %v1239, %v1247
      %v1256 = vadd.f32 %v1240, %v1248
      %v1257 = vadd.f32 %v1241, %v1249
      %v1258 = vadd.f32 %v1242, %v1250
      %v1259 = vadd.f32 %v1243, %v1251
      %v1260 = vadd.f32 %v1244, %v1252
      %v1261 = vadd.f32 %v1245, %v1253
      %1262 = vst [vmem:[%s190] sm:$0xff] %v1254
      %1263 = vst [vmem:[%s190 + $0x8] sm:$0xff] %v1255
      %1264 = vst [vmem:[%s190 + $0x10] sm:$0xff] %v1256
      %1265 = vst [vmem:[%s190 + $0x18] sm:$0xff] %v1257
      %1266 = vst [vmem:[%s190 + $0x20] sm:$0xff] %v1258
      %1267 = vst [vmem:[%s190 + $0x28] sm:$0xff] %v1259
      %1268 = vst [vmem:[%s190 + $0x30] sm:$0xff] %v1260
      %1269 = vst [vmem:[%s190 + $0x38] sm:$0xff] %v1261
      %p1270 = scmp.lt.s32.totalorder %s14, 1
      %s1271 = scalar_select %p1270, %s14, 1
      %s1272 = smul.addr %s1271, 8
      %s1273 = smul.addr %s1272, 8
      %s1274 = scalar_lea.vmem %s3, %s1273
      // Predicated region
      $region33: #{basic_block_forward.3} parent=31 // pred_check
        %p1275 = pneg %p105
      $region34: #{basic_block_forward.3} parent=31 // pred_check_branch
        %1277 = sbr.rel (%p1275) target = $region36
      $region35: #{basic_block_forward.3} parent=31 // pred_region
        _
      $region36: #{basic_block_forward.3} parent=31 // pred_fallthru
        _
    $region32: #{basic_block_forward.3} parent=5 // pred_fallthru
      _
    %p1278 = scmp.le.s32.totalorder 2, %s9
    // Predicated region
    $region37: #{basic_block_forward.3} parent=5 // pred_check
      %p1279 = pneg %p1278
    $region38: #{basic_block_forward.3} parent=5 // pred_check_branch
      %1281 = sbr.rel (%p1279) target = $region40
    $region39: #{basic_block_forward.3} parent=5 // pred_region
      %s1282 = ssub.s32 %s9, 2
      // Predicated region
      $region41: #{basic_block_forward.3} parent=39 // pred_check
        %p1283 = pneg %p111
      $region42: #{basic_block_forward.3} parent=39 // pred_check_branch
        %1285 = sbr.rel (%p1283) target = $region44
      $region43: #{basic_block_forward.3} parent=39 // pred_region
        %p1286 = scmp.lt.s32.totalorder %s15, 1
        %s1287 = scalar_select %p1286, %s15, 1
        %s1288 = smul.addr %s1287, 8
        %s1289 = smul.addr %s1288, 8
        %s1290 = scalar_lea.vmem %s3, %s1289
      $region44: #{basic_block_forward.3} parent=39 // pred_fallthru
        _
    $region40: #{basic_block_forward.3} parent=5 // pred_fallthru
      _
  $region6: #{basic_block_forward.3} parent=0 // loop_footer
    %s13 = sadd.s32 1, %s9
  $region7: #{basic_block_forward.3} parent=0 // loop_footer_branch
    %8 = sbr.rel target = $region3
  $region8: #{basic_block_forward.3} parent=0 // loop_exit
    _

</llo_original>
